<compile_context>
chip_gen: v5e
topology: v5e:2x2
jax: 0.10.0
libtpu: 0.0.40
codegen_flags: <defaults>
</compile_context>

<pallas_src>
import jax
import jax.numpy as jnp
import numpy as np
from jax.experimental import pallas as pl
from jax.experimental.pallas import tpu as pltpu


def _make_stack_kernel(num_layers, seq_len, batch, unroll_time):
    """Builds a fused kernel for `num_layers` PLAIN_ONLSTM layers."""

    def kernel(*refs):
        n_in = 1 + 5 * num_layers
        n_out = 3 * num_layers
        x_ref = refs[0]
        layer_refs = refs[1:n_in]
        out_refs = refs[n_in:n_in + n_out]
        ti_refs = refs[n_in + n_out:]

        prev_ref = x_ref  # (L, B, D_l): activations feeding layer l (VMEM resident)
        for l in range(num_layers):
            w_ih_ref, bias_ref, w_hh_ref, h0_ref, c0_ref = layer_refs[5 * l:5 * l + 5]
            out_ref, hT_ref, cT_ref = out_refs[3 * l:3 * l + 3]
            ti_ref = ti_refs[l]

            D = w_ih_ref.shape[0]
            H = w_hh_ref.shape[0]

            # ---- hoisted input transform: one MXU matmul for the whole sequence.
            # bias_ref already holds (b_ih + b_hh), folded once here.
            x2 = prev_ref[...].reshape(seq_len * batch, D)
            ti = jnp.dot(x2, w_ih_ref[...], preferred_element_type=jnp.float32)
            ti_ref[...] = (ti + bias_ref[...]).reshape(seq_len, batch, 4 * H)

            w_hh = w_hh_ref[...]  # hoisted out of the time loop

            # ---- sequential recurrence: only h @ W_hh is on the serial path;
            # (h, c) are loop-carried values (vregs), not VMEM scratch.
            def step(t, carry):
                h, c = carry
                gates = ti_ref[t] + jnp.dot(
                    h, w_hh, preferred_element_type=jnp.float32)
                # chunk order in the PyTorch module: outgate, cell, ingate, forget
                outgate = jax.nn.sigmoid(gates[:, 0 * H:1 * H])
                cell = jnp.tanh(gates[:, 1 * H:2 * H])
                ingate = jax.nn.sigmoid(gates[:, 2 * H:3 * H])
                forgetg = jax.nn.sigmoid(gates[:, 3 * H:4 * H])
                c_new = forgetg * c + ingate * cell
                h_new = outgate * jnp.tanh(c_new)
                out_ref[t] = h_new.astype(out_ref.dtype)
                return h_new, c_new

            hT, cT = jax.lax.fori_loop(
                0, seq_len, step, (h0_ref[...], c0_ref[...]), unroll=unroll_time)
            hT_ref[...] = hT.astype(hT_ref.dtype)
            cT_ref[...] = cT.astype(cT_ref.dtype)

            # next layer consumes this layer's hidden states directly from VMEM
            prev_ref = out_ref

    return kernel


def plain_onlstm_stack_forward(x, params, hidden, dropconnect=0.0):
    """Mirrors PLAIN_ONLSTMStack.forward in eval mode.

    x: (L, B, D0) float32
    params: list of (w_ih (D,4H), b_ih (4H,), w_hh (H,4H), b_hh (4H,)) per layer
    hidden: list of (h0 (B,H), c0 (B,H)) per layer
    Returns (output, prev_state, raw_outputs, outputs).
    """
    L, B, _ = x.shape
    num_layers = len(params)

    inputs = [x]
    in_specs = [pl.BlockSpec(memory_space=pltpu.MemorySpace.VMEM)]
    out_shape = []
    out_specs = []
    scratch_shapes = []
    for (w_ih, b_ih, w_hh, b_hh), (h0, c0) in zip(params, hidden):
        H = w_hh.shape[0]
        # eval-mode DropConnect: weight * (1 - dropout); fold both biases once.
        w_hh_eff = (w_hh * (1.0 - dropconnect)).astype(jnp.float32)
        bias = (b_ih + b_hh).reshape(1, 4 * H).astype(jnp.float32)
        inputs += [w_ih, bias, w_hh_eff, h0, c0]
        in_specs += [pl.BlockSpec(memory_space=pltpu.MemorySpace.VMEM)] * 5
        out_shape += [
            jax.ShapeDtypeStruct((L, B, H), x.dtype),  # per-step hidden states
            jax.ShapeDtypeStruct((B, H), x.dtype),     # final h
            jax.ShapeDtypeStruct((B, H), x.dtype),     # final c
        ]
        out_specs += [pl.BlockSpec(memory_space=pltpu.MemorySpace.VMEM)] * 3
        # per-layer precomputed input transform (L, B, 4H), VMEM resident
        scratch_shapes.append(pltpu.VMEM((L, B, 4 * H), jnp.float32))

    # fully unroll the time loop for short sequences (LLO scheduler visibility);
    # for long L fall back to a rolled fori_loop.
    unroll_time = True if L <= 32 else 1
    kernel = _make_stack_kernel(num_layers, L, B, unroll_time)

    results = pl.pallas_call(
        kernel,
        out_shape=tuple(out_shape),
        in_specs=in_specs,
        out_specs=tuple(out_specs),
        scratch_shapes=scratch_shapes,
    )(*inputs)

    raw_outputs = []
    prev_state = []
    for l in range(num_layers):
        out_l, hT_l, cT_l = results[3 * l], results[3 * l + 1], results[3 * l + 2]
        raw_outputs.append(out_l)
        prev_state.append((hT_l, cT_l))
    output = raw_outputs[-1]
    outputs = list(raw_outputs)  # LockedDropout is identity at eval time
    return output, prev_state, raw_outputs, outputs


# ---------- pure-JAX reference for verification ----------
def _ref_forward(x, params, hidden, dropconnect=0.0):
    prev = x
    states = list(hidden)
    raws = []
    for l, (w_ih, b_ih, w_hh, b_hh) in enumerate(params):
        w_hh = w_hh * (1.0 - dropconnect)
        ti = jnp.einsum('lbd,dh->lbh', prev, w_ih) + b_ih
        h, c = states[l]
        H = h.shape[-1]
        outs = []
        for t in range(x.shape[0]):
            gates = ti[t] + h @ w_hh + b_hh
            og = jax.nn.sigmoid(gates[:, 0 * H:1 * H])
            cg = jnp.tanh(gates[:, 1 * H:2 * H])
            ig = jax.nn.sigmoid(gates[:, 2 * H:3 * H])
            fg = jax.nn.sigmoid(gates[:, 3 * H:4 * H])
            c = fg * c + ig * cg
            h = og * jnp.tanh(c)
            outs.append(h)
        prev = jnp.stack(outs)
        raws.append(prev)
        states[l] = (h, c)
    return prev, states, raws


if __name__ == "__main__":
    # layer_sizes = [16, 32, 32]  -> 2 ON-LSTM cells, hidden=32
    layer_sizes = [16, 32, 32]
    L, B = 8, 2

    key = jax.random.PRNGKey(0)
    keys = jax.random.split(key, 1 + 4 * (len(layer_sizes) - 1))

    x = jax.random.normal(keys[0], (L, B, layer_sizes[0]), dtype=jnp.float32)

    params = []
    hidden = []
    k = 1
    for l in range(len(layer_sizes) - 1):
        D, H = layer_sizes[l], layer_sizes[l + 1]
        s_ih = 1.0 / np.sqrt(D)
        s_hh = 1.0 / np.sqrt(H)
        w_ih = jax.random.uniform(keys[k + 0], (D, 4 * H), jnp.float32, -s_ih, s_ih)
        b_ih = jax.random.uniform(keys[k + 1], (4 * H,), jnp.float32, -s_ih, s_ih)
        w_hh = jax.random.uniform(keys[k + 2], (H, 4 * H), jnp.float32, -s_hh, s_hh)
        b_hh = jax.random.uniform(keys[k + 3], (4 * H,), jnp.float32, -s_hh, s_hh)
        k += 4
        params.append((w_ih, b_ih, w_hh, b_hh))
        hidden.append((jnp.zeros((B, H), jnp.float32), jnp.zeros((B, H), jnp.float32)))

    output, prev_state, raw_outputs, outputs = plain_onlstm_stack_forward(
        x, params, hidden, dropconnect=0.0)
    output = jax.block_until_ready(output)

    ref_out, ref_states, ref_raws = _ref_forward(x, params, hidden, dropconnect=0.0)
    np.testing.assert_allclose(np.asarray(output), np.asarray(ref_out),
                               rtol=1e-5, atol=1e-5)
    for ro, rr in zip(raw_outputs, ref_raws):
        np.testing.assert_allclose(np.asarray(ro), np.asarray(rr),
                                   rtol=1e-5, atol=1e-5)
    for (h, c), (rh, rc) in zip(prev_state, ref_states):
        np.testing.assert_allclose(np.asarray(h), np.asarray(rh), rtol=1e-5, atol=1e-5)
        np.testing.assert_allclose(np.asarray(c), np.asarray(rc), rtol=1e-5, atol=1e-5)

    print("KERNEL_OK")
</pallas_src>

<mosaic_0001>
module attributes {stable_mosaic.version = 11 : i64} {
  func.func @kernel(%arg0: memref<8x2x16xf32, #tpu.memory_space<vmem>>, %arg1: memref<16x128xf32, #tpu.memory_space<vmem>>, %arg2: memref<1x128xf32, #tpu.memory_space<vmem>>, %arg3: memref<32x128xf32, #tpu.memory_space<vmem>>, %arg4: memref<2x32xf32, #tpu.memory_space<vmem>>, %arg5: memref<2x32xf32, #tpu.memory_space<vmem>>, %arg6: memref<32x128xf32, #tpu.memory_space<vmem>>, %arg7: memref<1x128xf32, #tpu.memory_space<vmem>>, %arg8: memref<32x128xf32, #tpu.memory_space<vmem>>, %arg9: memref<2x32xf32, #tpu.memory_space<vmem>>, %arg10: memref<2x32xf32, #tpu.memory_space<vmem>>, %arg11: memref<8x2x32xf32, #tpu.memory_space<vmem>>, %arg12: memref<2x32xf32, #tpu.memory_space<vmem>>, %arg13: memref<2x32xf32, #tpu.memory_space<vmem>>, %arg14: memref<8x2x32xf32, #tpu.memory_space<vmem>>, %arg15: memref<2x32xf32, #tpu.memory_space<vmem>>, %arg16: memref<2x32xf32, #tpu.memory_space<vmem>>, %arg17: memref<8x2x128xf32, #tpu.memory_space<vmem>>, %arg18: memref<8x2x128xf32, #tpu.memory_space<vmem>>) attributes {dimension_semantics = [], scalar_prefetch = 0 : i64, scratch_operands = 2 : i64, tpu.core_type = #tpu.core_type<tc>} {
    %c0 = arith.constant 0 : index
    %c0_0 = arith.constant 0 : index
    %c0_1 = arith.constant 0 : index
    %0 = vector.load %arg0[%c0, %c0_0, %c0_1] : memref<8x2x16xf32, #tpu.memory_space<vmem>>, vector<8x2x16xf32>
    %1 = vector.shape_cast %0 : vector<8x2x16xf32> to vector<16x16xf32>
    %c0_2 = arith.constant 0 : index
    %c0_3 = arith.constant 0 : index
    %2 = vector.load %arg1[%c0_2, %c0_3] : memref<16x128xf32, #tpu.memory_space<vmem>>, vector<16x128xf32>
    %cst = arith.constant dense<0.000000e+00> : vector<16x128xf32>
    %3 = tpu.matmul %1, %2, %cst {dimension_numbers = #tpu.dot_dimension_numbers<[1], [0], [0], [1], [0, 0, 1, 1], [], []>} : vector<16x16xf32>, vector<16x128xf32>, vector<16x128xf32> -> vector<16x128xf32>
    %c0_4 = arith.constant 0 : index
    %c0_5 = arith.constant 0 : index
    %4 = vector.load %arg2[%c0_4, %c0_5] : memref<1x128xf32, #tpu.memory_space<vmem>>, vector<1x128xf32>
    %5 = vector.broadcast %4 : vector<1x128xf32> to vector<16x128xf32>
    %6 = arith.addf %3, %5 : vector<16x128xf32>
    %7 = vector.shape_cast %6 : vector<16x128xf32> to vector<8x2x128xf32>
    %c0_6 = arith.constant 0 : index
    %c0_7 = arith.constant 0 : index
    %c0_8 = arith.constant 0 : index
    %8 = vector.load %arg17[%c0_6, %c0_7, %c0_8] : memref<8x2x128xf32, #tpu.memory_space<vmem>>, vector<8x2x128xf32>
    tpu.vector_store %arg17[%c0_6, %c0_7, %c0_8], %7 {strides = array<i32>} : memref<8x2x128xf32, #tpu.memory_space<vmem>>, vector<8x2x128xf32>,
    %c0_9 = arith.constant 0 : index
    %c0_10 = arith.constant 0 : index
    %9 = vector.load %arg3[%c0_9, %c0_10] : memref<32x128xf32, #tpu.memory_space<vmem>>, vector<32x128xf32>
    %c0_11 = arith.constant 0 : index
    %c0_12 = arith.constant 0 : index
    %10 = vector.load %arg4[%c0_11, %c0_12] : memref<2x32xf32, #tpu.memory_space<vmem>>, vector<2x32xf32>
    %c0_13 = arith.constant 0 : index
    %c0_14 = arith.constant 0 : index
    %11 = vector.load %arg5[%c0_13, %c0_14] : memref<2x32xf32, #tpu.memory_space<vmem>>, vector<2x32xf32>
    %c0_i32 = arith.constant 0 : i32
    %12 = arith.index_cast %c0_i32 : i32 to index
    %c0_15 = arith.constant 0 : index
    %c0_16 = arith.constant 0 : index
    %13 = vector.load %arg17[%12, %c0_15, %c0_16] : memref<8x2x128xf32, #tpu.memory_space<vmem>>, vector<1x2x128xf32>
    %14 = vector.shape_cast %13 : vector<1x2x128xf32> to vector<2x128xf32>
    %cst_17 = arith.constant dense<0.000000e+00> : vector<2x128xf32>
    %15 = tpu.matmul %10, %9, %cst_17 {dimension_numbers = #tpu.dot_dimension_numbers<[1], [0], [0], [1], [0, 0, 1, 1], [], []>} : vector<2x32xf32>, vector<32x128xf32>, vector<2x128xf32> -> vector<2x128xf32>
    %16 = arith.addf %14, %15 : vector<2x128xf32>
    %17 = vector.extract_strided_slice %16 {offsets = [0, 0], sizes = [2, 32], strides = [1, 1]} : vector<2x128xf32> to vector<2x32xf32>
    %18 = arith.negf %17 : vector<2x32xf32>
    %19 = math.exp %18 : vector<2x32xf32>
    %cst_18 = arith.constant 1.000000e+00 : f32
    %20 = vector.broadcast %cst_18 : f32 to vector<2x32xf32>
    %21 = arith.addf %20, %19 : vector<2x32xf32>
    %22 = arith.divf %20, %21 : vector<2x32xf32>
    %23 = vector.extract_strided_slice %16 {offsets = [0, 32], sizes = [2, 32], strides = [1, 1]} : vector<2x128xf32> to vector<2x32xf32>
    %24 = math.tanh %23 : vector<2x32xf32>
    %25 = vector.extract_strided_slice %16 {offsets = [0, 64], sizes = [2, 32], strides = [1, 1]} : vector<2x128xf32> to vector<2x32xf32>
    %26 = arith.negf %25 : vector<2x32xf32>
    %27 = math.exp %26 : vector<2x32xf32>
    %cst_19 = arith.constant 1.000000e+00 : f32
    %28 = vector.broadcast %cst_19 : f32 to vector<2x32xf32>
    %29 = arith.addf %28, %27 : vector<2x32xf32>
    %30 = arith.divf %28, %29 : vector<2x32xf32>
    %31 = vector.extract_strided_slice %16 {offsets = [0, 96], sizes = [2, 32], strides = [1, 1]} : vector<2x128xf32> to vector<2x32xf32>
    %32 = arith.negf %31 : vector<2x32xf32>
    %33 = math.exp %32 : vector<2x32xf32>
    %cst_20 = arith.constant 1.000000e+00 : f32
    %34 = vector.broadcast %cst_20 : f32 to vector<2x32xf32>
    %35 = arith.addf %34, %33 : vector<2x32xf32>
    %36 = arith.divf %34, %35 : vector<2x32xf32>
    %37 = arith.mulf %36, %11 : vector<2x32xf32>
    %38 = arith.mulf %30, %24 : vector<2x32xf32>
    %39 = arith.addf %37, %38 : vector<2x32xf32>
    %40 = math.tanh %39 : vector<2x32xf32>
    %41 = arith.mulf %22, %40 : vector<2x32xf32>
    %42 = arith.index_cast %c0_i32 : i32 to index
    %c0_21 = arith.constant 0 : index
    %c0_22 = arith.constant 0 : index
    %43 = vector.load %arg11[%42, %c0_21, %c0_22] : memref<8x2x32xf32, #tpu.memory_space<vmem>>, vector<1x2x32xf32>
    %44 = vector.shape_cast %43 : vector<1x2x32xf32> to vector<2x32xf32>
    %45 = vector.shape_cast %41 : vector<2x32xf32> to vector<1x2x32xf32>
    tpu.vector_store %arg11[%42, %c0_21, %c0_22], %45 {strides = array<i32>} : memref<8x2x32xf32, #tpu.memory_space<vmem>>, vector<1x2x32xf32>,
    %c1_i32 = arith.constant 1 : i32
    %46 = arith.index_cast %c1_i32 : i32 to index
    %c0_23 = arith.constant 0 : index
    %c0_24 = arith.constant 0 : index
    %47 = vector.load %arg17[%46, %c0_23, %c0_24] : memref<8x2x128xf32, #tpu.memory_space<vmem>>, vector<1x2x128xf32>
    %48 = vector.shape_cast %47 : vector<1x2x128xf32> to vector<2x128xf32>
    %cst_25 = arith.constant dense<0.000000e+00> : vector<2x128xf32>
    %49 = tpu.matmul %41, %9, %cst_25 {dimension_numbers = #tpu.dot_dimension_numbers<[1], [0], [0], [1], [0, 0, 1, 1], [], []>} : vector<2x32xf32>, vector<32x128xf32>, vector<2x128xf32> -> vector<2x128xf32>
    %50 = arith.addf %48, %49 : vector<2x128xf32>
    %51 = vector.extract_strided_slice %50 {offsets = [0, 0], sizes = [2, 32], strides = [1, 1]} : vector<2x128xf32> to vector<2x32xf32>
    %52 = arith.negf %51 : vector<2x32xf32>
    %53 = math.exp %52 : vector<2x32xf32>
    %cst_26 = arith.constant 1.000000e+00 : f32
    %54 = vector.broadcast %cst_26 : f32 to vector<2x32xf32>
    %55 = arith.addf %54, %53 : vector<2x32xf32>
    %56 = arith.divf %54, %55 : vector<2x32xf32>
    %57 = vector.extract_strided_slice %50 {offsets = [0, 32], sizes = [2, 32], strides = [1, 1]} : vector<2x128xf32> to vector<2x32xf32>
    %58 = math.tanh %57 : vector<2x32xf32>
    %59 = vector.extract_strided_slice %50 {offsets = [0, 64], sizes = [2, 32], strides = [1, 1]} : vector<2x128xf32> to vector<2x32xf32>
    %60 = arith.negf %59 : vector<2x32xf32>
    %61 = math.exp %60 : vector<2x32xf32>
    %cst_27 = arith.constant 1.000000e+00 : f32
    %62 = vector.broadcast %cst_27 : f32 to vector<2x32xf32>
    %63 = arith.addf %62, %61 : vector<2x32xf32>
    %64 = arith.divf %62, %63 : vector<2x32xf32>
    %65 = vector.extract_strided_slice %50 {offsets = [0, 96], sizes = [2, 32], strides = [1, 1]} : vector<2x128xf32> to vector<2x32xf32>
    %66 = arith.negf %65 : vector<2x32xf32>
    %67 = math.exp %66 : vector<2x32xf32>
    %cst_28 = arith.constant 1.000000e+00 : f32
    %68 = vector.broadcast %cst_28 : f32 to vector<2x32xf32>
    %69 = arith.addf %68, %67 : vector<2x32xf32>
    %70 = arith.divf %68, %69 : vector<2x32xf32>
    %71 = arith.mulf %70, %39 : vector<2x32xf32>
    %72 = arith.mulf %64, %58 : vector<2x32xf32>
    %73 = arith.addf %71, %72 : vector<2x32xf32>
    %74 = math.tanh %73 : vector<2x32xf32>
    %75 = arith.mulf %56, %74 : vector<2x32xf32>
    %76 = arith.index_cast %c1_i32 : i32 to index
    %c0_29 = arith.constant 0 : index
    %c0_30 = arith.constant 0 : index
    %77 = vector.load %arg11[%76, %c0_29, %c0_30] : memref<8x2x32xf32, #tpu.memory_space<vmem>>, vector<1x2x32xf32>
    %78 = vector.shape_cast %77 : vector<1x2x32xf32> to vector<2x32xf32>
    %79 = vector.shape_cast %75 : vector<2x32xf32> to vector<1x2x32xf32>
    tpu.vector_store %arg11[%76, %c0_29, %c0_30], %79 {strides = array<i32>} : memref<8x2x32xf32, #tpu.memory_space<vmem>>, vector<1x2x32xf32>,
    %c2_i32 = arith.constant 2 : i32
    %80 = arith.index_cast %c2_i32 : i32 to index
    %c0_31 = arith.constant 0 : index
    %c0_32 = arith.constant 0 : index
    %81 = vector.load %arg17[%80, %c0_31, %c0_32] : memref<8x2x128xf32, #tpu.memory_space<vmem>>, vector<1x2x128xf32>
    %82 = vector.shape_cast %81 : vector<1x2x128xf32> to vector<2x128xf32>
    %cst_33 = arith.constant dense<0.000000e+00> : vector<2x128xf32>
    %83 = tpu.matmul %75, %9, %cst_33 {dimension_numbers = #tpu.dot_dimension_numbers<[1], [0], [0], [1], [0, 0, 1, 1], [], []>} : vector<2x32xf32>, vector<32x128xf32>, vector<2x128xf32> -> vector<2x128xf32>
    %84 = arith.addf %82, %83 : vector<2x128xf32>
    %85 = vector.extract_strided_slice %84 {offsets = [0, 0], sizes = [2, 32], strides = [1, 1]} : vector<2x128xf32> to vector<2x32xf32>
    %86 = arith.negf %85 : vector<2x32xf32>
    %87 = math.exp %86 : vector<2x32xf32>
    %cst_34 = arith.constant 1.000000e+00 : f32
    %88 = vector.broadcast %cst_34 : f32 to vector<2x32xf32>
    %89 = arith.addf %88, %87 : vector<2x32xf32>
    %90 = arith.divf %88, %89 : vector<2x32xf32>
    %91 = vector.extract_strided_slice %84 {offsets = [0, 32], sizes = [2, 32], strides = [1, 1]} : vector<2x128xf32> to vector<2x32xf32>
    %92 = math.tanh %91 : vector<2x32xf32>
    %93 = vector.extract_strided_slice %84 {offsets = [0, 64], sizes = [2, 32], strides = [1, 1]} : vector<2x128xf32> to vector<2x32xf32>
    %94 = arith.negf %93 : vector<2x32xf32>
    %95 = math.exp %94 : vector<2x32xf32>
    %cst_35 = arith.constant 1.000000e+00 : f32
    %96 = vector.broadcast %cst_35 : f32 to vector<2x32xf32>
    %97 = arith.addf %96, %95 : vector<2x32xf32>
    %98 = arith.divf %96, %97 : vector<2x32xf32>
    %99 = vector.extract_strided_slice %84 {offsets = [0, 96], sizes = [2, 32], strides = [1, 1]} : vector<2x128xf32> to vector<2x32xf32>
    %100 = arith.negf %99 : vector<2x32xf32>
    %101 = math.exp %100 : vector<2x32xf32>
    %cst_36 = arith.constant 1.000000e+00 : f32
    %102 = vector.broadcast %cst_36 : f32 to vector<2x32xf32>
    %103 = arith.addf %102, %101 : vector<2x32xf32>
    %104 = arith.divf %102, %103 : vector<2x32xf32>
    %105 = arith.mulf %104, %73 : vector<2x32xf32>
    %106 = arith.mulf %98, %92 : vector<2x32xf32>
    %107 = arith.addf %105, %106 : vector<2x32xf32>
    %108 = math.tanh %107 : vector<2x32xf32>
    %109 = arith.mulf %90, %108 : vector<2x32xf32>
    %110 = arith.index_cast %c2_i32 : i32 to index
    %c0_37 = arith.constant 0 : index
    %c0_38 = arith.constant 0 : index
    %111 = vector.load %arg11[%110, %c0_37, %c0_38] : memref<8x2x32xf32, #tpu.memory_space<vmem>>, vector<1x2x32xf32>
    %112 = vector.shape_cast %111 : vector<1x2x32xf32> to vector<2x32xf32>
    %113 = vector.shape_cast %109 : vector<2x32xf32> to vector<1x2x32xf32>
    tpu.vector_store %arg11[%110, %c0_37, %c0_38], %113 {strides = array<i32>} : memref<8x2x32xf32, #tpu.memory_space<vmem>>, vector<1x2x32xf32>,
    %c3_i32 = arith.constant 3 : i32
    %114 = arith.index_cast %c3_i32 : i32 to index
    %c0_39 = arith.constant 0 : index
    %c0_40 = arith.constant 0 : index
    %115 = vector.load %arg17[%114, %c0_39, %c0_40] : memref<8x2x128xf32, #tpu.memory_space<vmem>>, vector<1x2x128xf32>
    %116 = vector.shape_cast %115 : vector<1x2x128xf32> to vector<2x128xf32>
    %cst_41 = arith.constant dense<0.000000e+00> : vector<2x128xf32>
    %117 = tpu.matmul %109, %9, %cst_41 {dimension_numbers = #tpu.dot_dimension_numbers<[1], [0], [0], [1], [0, 0, 1, 1], [], []>} : vector<2x32xf32>, vector<32x128xf32>, vector<2x128xf32> -> vector<2x128xf32>
    %118 = arith.addf %116, %117 : vector<2x128xf32>
    %119 = vector.extract_strided_slice %118 {offsets = [0, 0], sizes = [2, 32], strides = [1, 1]} : vector<2x128xf32> to vector<2x32xf32>
    %120 = arith.negf %119 : vector<2x32xf32>
    %121 = math.exp %120 : vector<2x32xf32>
    %cst_42 = arith.constant 1.000000e+00 : f32
    %122 = vector.broadcast %cst_42 : f32 to vector<2x32xf32>
    %123 = arith.addf %122, %121 : vector<2x32xf32>
    %124 = arith.divf %122, %123 : vector<2x32xf32>
    %125 = vector.extract_strided_slice %118 {offsets = [0, 32], sizes = [2, 32], strides = [1, 1]} : vector<2x128xf32> to vector<2x32xf32>
    %126 = math.tanh %125 : vector<2x32xf32>
    %127 = vector.extract_strided_slice %118 {offsets = [0, 64], sizes = [2, 32], strides = [1, 1]} : vector<2x128xf32> to vector<2x32xf32>
    %128 = arith.negf %127 : vector<2x32xf32>
    %129 = math.exp %128 : vector<2x32xf32>
    %cst_43 = arith.constant 1.000000e+00 : f32
    %130 = vector.broadcast %cst_43 : f32 to vector<2x32xf32>
    %131 = arith.addf %130, %129 : vector<2x32xf32>
    %132 = arith.divf %130, %131 : vector<2x32xf32>
    %133 = vector.extract_strided_slice %118 {offsets = [0, 96], sizes = [2, 32], strides = [1, 1]} : vector<2x128xf32> to vector<2x32xf32>
    %134 = arith.negf %133 : vector<2x32xf32>
    %135 = math.exp %134 : vector<2x32xf32>
    %cst_44 = arith.constant 1.000000e+00 : f32
    %136 = vector.broadcast %cst_44 : f32 to vector<2x32xf32>
    %137 = arith.addf %136, %135 : vector<2x32xf32>
    %138 = arith.divf %136, %137 : vector<2x32xf32>
    %139 = arith.mulf %138, %107 : vector<2x32xf32>
    %140 = arith.mulf %132, %126 : vector<2x32xf32>
    %141 = arith.addf %139, %140 : vector<2x32xf32>
    %142 = math.tanh %141 : vector<2x32xf32>
    %143 = arith.mulf %124, %142 : vector<2x32xf32>
    %144 = arith.index_cast %c3_i32 : i32 to index
    %c0_45 = arith.constant 0 : index
    %c0_46 = arith.constant 0 : index
    %145 = vector.load %arg11[%144, %c0_45, %c0_46] : memref<8x2x32xf32, #tpu.memory_space<vmem>>, vector<1x2x32xf32>
    %146 = vector.shape_cast %145 : vector<1x2x32xf32> to vector<2x32xf32>
    %147 = vector.shape_cast %143 : vector<2x32xf32> to vector<1x2x32xf32>
    tpu.vector_store %arg11[%144, %c0_45, %c0_46], %147 {strides = array<i32>} : memref<8x2x32xf32, #tpu.memory_space<vmem>>, vector<1x2x32xf32>,
    %c4_i32 = arith.constant 4 : i32
    %148 = arith.index_cast %c4_i32 : i32 to index
    %c0_47 = arith.constant 0 : index
    %c0_48 = arith.constant 0 : index
    %149 = vector.load %arg17[%148, %c0_47, %c0_48] : memref<8x2x128xf32, #tpu.memory_space<vmem>>, vector<1x2x128xf32>
    %150 = vector.shape_cast %149 : vector<1x2x128xf32> to vector<2x128xf32>
    %cst_49 = arith.constant dense<0.000000e+00> : vector<2x128xf32>
    %151 = tpu.matmul %143, %9, %cst_49 {dimension_numbers = #tpu.dot_dimension_numbers<[1], [0], [0], [1], [0, 0, 1, 1], [], []>} : vector<2x32xf32>, vector<32x128xf32>, vector<2x128xf32> -> vector<2x128xf32>
    %152 = arith.addf %150, %151 : vector<2x128xf32>
    %153 = vector.extract_strided_slice %152 {offsets = [0, 0], sizes = [2, 32], strides = [1, 1]} : vector<2x128xf32> to vector<2x32xf32>
    %154 = arith.negf %153 : vector<2x32xf32>
    %155 = math.exp %154 : vector<2x32xf32>
    %cst_50 = arith.constant 1.000000e+00 : f32
    %156 = vector.broadcast %cst_50 : f32 to vector<2x32xf32>
    %157 = arith.addf %156, %155 : vector<2x32xf32>
    %158 = arith.divf %156, %157 : vector<2x32xf32>
    %159 = vector.extract_strided_slice %152 {offsets = [0, 32], sizes = [2, 32], strides = [1, 1]} : vector<2x128xf32> to vector<2x32xf32>
    %160 = math.tanh %159 : vector<2x32xf32>
    %161 = vector.extract_strided_slice %152 {offsets = [0, 64], sizes = [2, 32], strides = [1, 1]} : vector<2x128xf32> to vector<2x32xf32>
    %162 = arith.negf %161 : vector<2x32xf32>
    %163 = math.exp %162 : vector<2x32xf32>
    %cst_51 = arith.constant 1.000000e+00 : f32
    %164 = vector.broadcast %cst_51 : f32 to vector<2x32xf32>
    %165 = arith.addf %164, %163 : vector<2x32xf32>
    %166 = arith.divf %164, %165 : vector<2x32xf32>
    %167 = vector.extract_strided_slice %152 {offsets = [0, 96], sizes = [2, 32], strides = [1, 1]} : vector<2x128xf32> to vector<2x32xf32>
    %168 = arith.negf %167 : vector<2x32xf32>
    %169 = math.exp %168 : vector<2x32xf32>
    %cst_52 = arith.constant 1.000000e+00 : f32
    %170 = vector.broadcast %cst_52 : f32 to vector<2x32xf32>
    %171 = arith.addf %170, %169 : vector<2x32xf32>
    %172 = arith.divf %170, %171 : vector<2x32xf32>
    %173 = arith.mulf %172, %141 : vector<2x32xf32>
    %174 = arith.mulf %166, %160 : vector<2x32xf32>
    %175 = arith.addf %173, %174 : vector<2x32xf32>
    %176 = math.tanh %175 : vector<2x32xf32>
    %177 = arith.mulf %158, %176 : vector<2x32xf32>
    %178 = arith.index_cast %c4_i32 : i32 to index
    %c0_53 = arith.constant 0 : index
    %c0_54 = arith.constant 0 : index
    %179 = vector.load %arg11[%178, %c0_53, %c0_54] : memref<8x2x32xf32, #tpu.memory_space<vmem>>, vector<1x2x32xf32>
    %180 = vector.shape_cast %179 : vector<1x2x32xf32> to vector<2x32xf32>
    %181 = vector.shape_cast %177 : vector<2x32xf32> to vector<1x2x32xf32>
    tpu.vector_store %arg11[%178, %c0_53, %c0_54], %181 {strides = array<i32>} : memref<8x2x32xf32, #tpu.memory_space<vmem>>, vector<1x2x32xf32>,
    %c5_i32 = arith.constant 5 : i32
    %182 = arith.index_cast %c5_i32 : i32 to index
    %c0_55 = arith.constant 0 : index
    %c0_56 = arith.constant 0 : index
    %183 = vector.load %arg17[%182, %c0_55, %c0_56] : memref<8x2x128xf32, #tpu.memory_space<vmem>>, vector<1x2x128xf32>
    %184 = vector.shape_cast %183 : vector<1x2x128xf32> to vector<2x128xf32>
    %cst_57 = arith.constant dense<0.000000e+00> : vector<2x128xf32>
    %185 = tpu.matmul %177, %9, %cst_57 {dimension_numbers = #tpu.dot_dimension_numbers<[1], [0], [0], [1], [0, 0, 1, 1], [], []>} : vector<2x32xf32>, vector<32x128xf32>, vector<2x128xf32> -> vector<2x128xf32>
    %186 = arith.addf %184, %185 : vector<2x128xf32>
    %187 = vector.extract_strided_slice %186 {offsets = [0, 0], sizes = [2, 32], strides = [1, 1]} : vector<2x128xf32> to vector<2x32xf32>
    %188 = arith.negf %187 : vector<2x32xf32>
    %189 = math.exp %188 : vector<2x32xf32>
    %cst_58 = arith.constant 1.000000e+00 : f32
    %190 = vector.broadcast %cst_58 : f32 to vector<2x32xf32>
    %191 = arith.addf %190, %189 : vector<2x32xf32>
    %192 = arith.divf %190, %191 : vector<2x32xf32>
    %193 = vector.extract_strided_slice %186 {offsets = [0, 32], sizes = [2, 32], strides = [1, 1]} : vector<2x128xf32> to vector<2x32xf32>
    %194 = math.tanh %193 : vector<2x32xf32>
    %195 = vector.extract_strided_slice %186 {offsets = [0, 64], sizes = [2, 32], strides = [1, 1]} : vector<2x128xf32> to vector<2x32xf32>
    %196 = arith.negf %195 : vector<2x32xf32>
    %197 = math.exp %196 : vector<2x32xf32>
    %cst_59 = arith.constant 1.000000e+00 : f32
    %198 = vector.broadcast %cst_59 : f32 to vector<2x32xf32>
    %199 = arith.addf %198, %197 : vector<2x32xf32>
    %200 = arith.divf %198, %199 : vector<2x32xf32>
    %201 = vector.extract_strided_slice %186 {offsets = [0, 96], sizes = [2, 32], strides = [1, 1]} : vector<2x128xf32> to vector<2x32xf32>
    %202 = arith.negf %201 : vector<2x32xf32>
    %203 = math.exp %202 : vector<2x32xf32>
    %cst_60 = arith.constant 1.000000e+00 : f32
    %204 = vector.broadcast %cst_60 : f32 to vector<2x32xf32>
    %205 = arith.addf %204, %203 : vector<2x32xf32>
    %206 = arith.divf %204, %205 : vector<2x32xf32>
    %207 = arith.mulf %206, %175 : vector<2x32xf32>
    %208 = arith.mulf %200, %194 : vector<2x32xf32>
    %209 = arith.addf %207, %208 : vector<2x32xf32>
    %210 = math.tanh %209 : vector<2x32xf32>
    %211 = arith.mulf %192, %210 : vector<2x32xf32>
    %212 = arith.index_cast %c5_i32 : i32 to index
    %c0_61 = arith.constant 0 : index
    %c0_62 = arith.constant 0 : index
    %213 = vector.load %arg11[%212, %c0_61, %c0_62] : memref<8x2x32xf32, #tpu.memory_space<vmem>>, vector<1x2x32xf32>
    %214 = vector.shape_cast %213 : vector<1x2x32xf32> to vector<2x32xf32>
    %215 = vector.shape_cast %211 : vector<2x32xf32> to vector<1x2x32xf32>
    tpu.vector_store %arg11[%212, %c0_61, %c0_62], %215 {strides = array<i32>} : memref<8x2x32xf32, #tpu.memory_space<vmem>>, vector<1x2x32xf32>,
    %c6_i32 = arith.constant 6 : i32
    %216 = arith.index_cast %c6_i32 : i32 to index
    %c0_63 = arith.constant 0 : index
    %c0_64 = arith.constant 0 : index
    %217 = vector.load %arg17[%216, %c0_63, %c0_64] : memref<8x2x128xf32, #tpu.memory_space<vmem>>, vector<1x2x128xf32>
    %218 = vector.shape_cast %217 : vector<1x2x128xf32> to vector<2x128xf32>
    %cst_65 = arith.constant dense<0.000000e+00> : vector<2x128xf32>
    %219 = tpu.matmul %211, %9, %cst_65 {dimension_numbers = #tpu.dot_dimension_numbers<[1], [0], [0], [1], [0, 0, 1, 1], [], []>} : vector<2x32xf32>, vector<32x128xf32>, vector<2x128xf32> -> vector<2x128xf32>
    %220 = arith.addf %218, %219 : vector<2x128xf32>
    %221 = vector.extract_strided_slice %220 {offsets = [0, 0], sizes = [2, 32], strides = [1, 1]} : vector<2x128xf32> to vector<2x32xf32>
    %222 = arith.negf %221 : vector<2x32xf32>
    %223 = math.exp %222 : vector<2x32xf32>
    %cst_66 = arith.constant 1.000000e+00 : f32
    %224 = vector.broadcast %cst_66 : f32 to vector<2x32xf32>
    %225 = arith.addf %224, %223 : vector<2x32xf32>
    %226 = arith.divf %224, %225 : vector<2x32xf32>
    %227 = vector.extract_strided_slice %220 {offsets = [0, 32], sizes = [2, 32], strides = [1, 1]} : vector<2x128xf32> to vector<2x32xf32>
    %228 = math.tanh %227 : vector<2x32xf32>
    %229 = vector.extract_strided_slice %220 {offsets = [0, 64], sizes = [2, 32], strides = [1, 1]} : vector<2x128xf32> to vector<2x32xf32>
    %230 = arith.negf %229 : vector<2x32xf32>
    %231 = math.exp %230 : vector<2x32xf32>
    %cst_67 = arith.constant 1.000000e+00 : f32
    %232 = vector.broadcast %cst_67 : f32 to vector<2x32xf32>
    %233 = arith.addf %232, %231 : vector<2x32xf32>
    %234 = arith.divf %232, %233 : vector<2x32xf32>
    %235 = vector.extract_strided_slice %220 {offsets = [0, 96], sizes = [2, 32], strides = [1, 1]} : vector<2x128xf32> to vector<2x32xf32>
    %236 = arith.negf %235 : vector<2x32xf32>
    %237 = math.exp %236 : vector<2x32xf32>
    %cst_68 = arith.constant 1.000000e+00 : f32
    %238 = vector.broadcast %cst_68 : f32 to vector<2x32xf32>
    %239 = arith.addf %238, %237 : vector<2x32xf32>
    %240 = arith.divf %238, %239 : vector<2x32xf32>
    %241 = arith.mulf %240, %209 : vector<2x32xf32>
    %242 = arith.mulf %234, %228 : vector<2x32xf32>
    %243 = arith.addf %241, %242 : vector<2x32xf32>
    %244 = math.tanh %243 : vector<2x32xf32>
    %245 = arith.mulf %226, %244 : vector<2x32xf32>
    %246 = arith.index_cast %c6_i32 : i32 to index
    %c0_69 = arith.constant 0 : index
    %c0_70 = arith.constant 0 : index
    %247 = vector.load %arg11[%246, %c0_69, %c0_70] : memref<8x2x32xf32, #tpu.memory_space<vmem>>, vector<1x2x32xf32>
    %248 = vector.shape_cast %247 : vector<1x2x32xf32> to vector<2x32xf32>
    %249 = vector.shape_cast %245 : vector<2x32xf32> to vector<1x2x32xf32>
    tpu.vector_store %arg11[%246, %c0_69, %c0_70], %249 {strides = array<i32>} : memref<8x2x32xf32, #tpu.memory_space<vmem>>, vector<1x2x32xf32>,
    %c7_i32 = arith.constant 7 : i32
    %250 = arith.index_cast %c7_i32 : i32 to index
    %c0_71 = arith.constant 0 : index
    %c0_72 = arith.constant 0 : index
    %251 = vector.load %arg17[%250, %c0_71, %c0_72] : memref<8x2x128xf32, #tpu.memory_space<vmem>>, vector<1x2x128xf32>
    %252 = vector.shape_cast %251 : vector<1x2x128xf32> to vector<2x128xf32>
    %cst_73 = arith.constant dense<0.000000e+00> : vector<2x128xf32>
    %253 = tpu.matmul %245, %9, %cst_73 {dimension_numbers = #tpu.dot_dimension_numbers<[1], [0], [0], [1], [0, 0, 1, 1], [], []>} : vector<2x32xf32>, vector<32x128xf32>, vector<2x128xf32> -> vector<2x128xf32>
    %254 = arith.addf %252, %253 : vector<2x128xf32>
    %255 = vector.extract_strided_slice %254 {offsets = [0, 0], sizes = [2, 32], strides = [1, 1]} : vector<2x128xf32> to vector<2x32xf32>
    %256 = arith.negf %255 : vector<2x32xf32>
    %257 = math.exp %256 : vector<2x32xf32>
    %cst_74 = arith.constant 1.000000e+00 : f32
    %258 = vector.broadcast %cst_74 : f32 to vector<2x32xf32>
    %259 = arith.addf %258, %257 : vector<2x32xf32>
    %260 = arith.divf %258, %259 : vector<2x32xf32>
    %261 = vector.extract_strided_slice %254 {offsets = [0, 32], sizes = [2, 32], strides = [1, 1]} : vector<2x128xf32> to vector<2x32xf32>
    %262 = math.tanh %261 : vector<2x32xf32>
    %263 = vector.extract_strided_slice %254 {offsets = [0, 64], sizes = [2, 32], strides = [1, 1]} : vector<2x128xf32> to vector<2x32xf32>
    %264 = arith.negf %263 : vector<2x32xf32>
    %265 = math.exp %264 : vector<2x32xf32>
    %cst_75 = arith.constant 1.000000e+00 : f32
    %266 = vector.broadcast %cst_75 : f32 to vector<2x32xf32>
    %267 = arith.addf %266, %265 : vector<2x32xf32>
    %268 = arith.divf %266, %267 : vector<2x32xf32>
    %269 = vector.extract_strided_slice %254 {offsets = [0, 96], sizes = [2, 32], strides = [1, 1]} : vector<2x128xf32> to vector<2x32xf32>
    %270 = arith.negf %269 : vector<2x32xf32>
    %271 = math.exp %270 : vector<2x32xf32>
    %cst_76 = arith.constant 1.000000e+00 : f32
    %272 = vector.broadcast %cst_76 : f32 to vector<2x32xf32>
    %273 = arith.addf %272, %271 : vector<2x32xf32>
    %274 = arith.divf %272, %273 : vector<2x32xf32>
    %275 = arith.mulf %274, %243 : vector<2x32xf32>
    %276 = arith.mulf %268, %262 : vector<2x32xf32>
    %277 = arith.addf %275, %276 : vector<2x32xf32>
    %278 = math.tanh %277 : vector<2x32xf32>
    %279 = arith.mulf %260, %278 : vector<2x32xf32>
    %280 = arith.index_cast %c7_i32 : i32 to index
    %c0_77 = arith.constant 0 : index
    %c0_78 = arith.constant 0 : index
    %281 = vector.load %arg11[%280, %c0_77, %c0_78] : memref<8x2x32xf32, #tpu.memory_space<vmem>>, vector<1x2x32xf32>
    %282 = vector.shape_cast %281 : vector<1x2x32xf32> to vector<2x32xf32>
    %283 = vector.shape_cast %279 : vector<2x32xf32> to vector<1x2x32xf32>
    tpu.vector_store %arg11[%280, %c0_77, %c0_78], %283 {strides = array<i32>} : memref<8x2x32xf32, #tpu.memory_space<vmem>>, vector<1x2x32xf32>,
    %c8_i32 = arith.constant 8 : i32
    %c0_79 = arith.constant 0 : index
    %c0_80 = arith.constant 0 : index
    %284 = vector.load %arg12[%c0_79, %c0_80] : memref<2x32xf32, #tpu.memory_space<vmem>>, vector<2x32xf32>
    tpu.vector_store %arg12[%c0_79, %c0_80], %279 {strides = array<i32>} : memref<2x32xf32, #tpu.memory_space<vmem>>, vector<2x32xf32>,
    %c0_81 = arith.constant 0 : index
    %c0_82 = arith.constant 0 : index
    %285 = vector.load %arg13[%c0_81, %c0_82] : memref<2x32xf32, #tpu.memory_space<vmem>>, vector<2x32xf32>
    tpu.vector_store %arg13[%c0_81, %c0_82], %277 {strides = array<i32>} : memref<2x32xf32, #tpu.memory_space<vmem>>, vector<2x32xf32>,
    %c0_83 = arith.constant 0 : index
    %c0_84 = arith.constant 0 : index
    %c0_85 = arith.constant 0 : index
    %286 = vector.load %arg11[%c0_83, %c0_84, %c0_85] : memref<8x2x32xf32, #tpu.memory_space<vmem>>, vector<8x2x32xf32>
    %287 = vector.shape_cast %286 : vector<8x2x32xf32> to vector<16x32xf32>
    %c0_86 = arith.constant 0 : index
    %c0_87 = arith.constant 0 : index
    %288 = vector.load %arg6[%c0_86, %c0_87] : memref<32x128xf32, #tpu.memory_space<vmem>>, vector<32x128xf32>
    %cst_88 = arith.constant dense<0.000000e+00> : vector<16x128xf32>
    %289 = tpu.matmul %287, %288, %cst_88 {dimension_numbers = #tpu.dot_dimension_numbers<[1], [0], [0], [1], [0, 0, 1, 1], [], []>} : vector<16x32xf32>, vector<32x128xf32>, vector<16x128xf32> -> vector<16x128xf32>
    %c0_89 = arith.constant 0 : index
    %c0_90 = arith.constant 0 : index
    %290 = vector.load %arg7[%c0_89, %c0_90] : memref<1x128xf32, #tpu.memory_space<vmem>>, vector<1x128xf32>
    %291 = vector.broadcast %290 : vector<1x128xf32> to vector<16x128xf32>
    %292 = arith.addf %289, %291 : vector<16x128xf32>
    %293 = vector.shape_cast %292 : vector<16x128xf32> to vector<8x2x128xf32>
    %c0_91 = arith.constant 0 : index
    %c0_92 = arith.constant 0 : index
    %c0_93 = arith.constant 0 : index
    %294 = vector.load %arg18[%c0_91, %c0_92, %c0_93] : memref<8x2x128xf32, #tpu.memory_space<vmem>>, vector<8x2x128xf32>
    tpu.vector_store %arg18[%c0_91, %c0_92, %c0_93], %293 {strides = array<i32>} : memref<8x2x128xf32, #tpu.memory_space<vmem>>, vector<8x2x128xf32>,
    %c0_94 = arith.constant 0 : index
    %c0_95 = arith.constant 0 : index
    %295 = vector.load %arg8[%c0_94, %c0_95] : memref<32x128xf32, #tpu.memory_space<vmem>>, vector<32x128xf32>
    %c0_96 = arith.constant 0 : index
    %c0_97 = arith.constant 0 : index
    %296 = vector.load %arg9[%c0_96, %c0_97] : memref<2x32xf32, #tpu.memory_space<vmem>>, vector<2x32xf32>
    %c0_98 = arith.constant 0 : index
    %c0_99 = arith.constant 0 : index
    %297 = vector.load %arg10[%c0_98, %c0_99] : memref<2x32xf32, #tpu.memory_space<vmem>>, vector<2x32xf32>
    %c0_i32_100 = arith.constant 0 : i32
    %298 = arith.index_cast %c0_i32_100 : i32 to index
    %c0_101 = arith.constant 0 : index
    %c0_102 = arith.constant 0 : index
    %299 = vector.load %arg18[%298, %c0_101, %c0_102] : memref<8x2x128xf32, #tpu.memory_space<vmem>>, vector<1x2x128xf32>
    %300 = vector.shape_cast %299 : vector<1x2x128xf32> to vector<2x128xf32>
    %cst_103 = arith.constant dense<0.000000e+00> : vector<2x128xf32>
    %301 = tpu.matmul %296, %295, %cst_103 {dimension_numbers = #tpu.dot_dimension_numbers<[1], [0], [0], [1], [0, 0, 1, 1], [], []>} : vector<2x32xf32>, vector<32x128xf32>, vector<2x128xf32> -> vector<2x128xf32>
    %302 = arith.addf %300, %301 : vector<2x128xf32>
    %303 = vector.extract_strided_slice %302 {offsets = [0, 0], sizes = [2, 32], strides = [1, 1]} : vector<2x128xf32> to vector<2x32xf32>
    %304 = arith.negf %303 : vector<2x32xf32>
    %305 = math.exp %304 : vector<2x32xf32>
    %cst_104 = arith.constant 1.000000e+00 : f32
    %306 = vector.broadcast %cst_104 : f32 to vector<2x32xf32>
    %307 = arith.addf %306, %305 : vector<2x32xf32>
    %308 = arith.divf %306, %307 : vector<2x32xf32>
    %309 = vector.extract_strided_slice %302 {offsets = [0, 32], sizes = [2, 32], strides = [1, 1]} : vector<2x128xf32> to vector<2x32xf32>
    %310 = math.tanh %309 : vector<2x32xf32>
    %311 = vector.extract_strided_slice %302 {offsets = [0, 64], sizes = [2, 32], strides = [1, 1]} : vector<2x128xf32> to vector<2x32xf32>
    %312 = arith.negf %311 : vector<2x32xf32>
    %313 = math.exp %312 : vector<2x32xf32>
    %cst_105 = arith.constant 1.000000e+00 : f32
    %314 = vector.broadcast %cst_105 : f32 to vector<2x32xf32>
    %315 = arith.addf %314, %313 : vector<2x32xf32>
    %316 = arith.divf %314, %315 : vector<2x32xf32>
    %317 = vector.extract_strided_slice %302 {offsets = [0, 96], sizes = [2, 32], strides = [1, 1]} : vector<2x128xf32> to vector<2x32xf32>
    %318 = arith.negf %317 : vector<2x32xf32>
    %319 = math.exp %318 : vector<2x32xf32>
    %cst_106 = arith.constant 1.000000e+00 : f32
    %320 = vector.broadcast %cst_106 : f32 to vector<2x32xf32>
    %321 = arith.addf %320, %319 : vector<2x32xf32>
    %322 = arith.divf %320, %321 : vector<2x32xf32>
    %323 = arith.mulf %322, %297 : vector<2x32xf32>
    %324 = arith.mulf %316, %310 : vector<2x32xf32>
    %325 = arith.addf %323, %324 : vector<2x32xf32>
    %326 = math.tanh %325 : vector<2x32xf32>
    %327 = arith.mulf %308, %326 : vector<2x32xf32>
    %328 = arith.index_cast %c0_i32_100 : i32 to index
    %c0_107 = arith.constant 0 : index
    %c0_108 = arith.constant 0 : index
    %329 = vector.load %arg14[%328, %c0_107, %c0_108] : memref<8x2x32xf32, #tpu.memory_space<vmem>>, vector<1x2x32xf32>
    %330 = vector.shape_cast %329 : vector<1x2x32xf32> to vector<2x32xf32>
    %331 = vector.shape_cast %327 : vector<2x32xf32> to vector<1x2x32xf32>
    tpu.vector_store %arg14[%328, %c0_107, %c0_108], %331 {strides = array<i32>} : memref<8x2x32xf32, #tpu.memory_space<vmem>>, vector<1x2x32xf32>,
    %c1_i32_109 = arith.constant 1 : i32
    %332 = arith.index_cast %c1_i32_109 : i32 to index
    %c0_110 = arith.constant 0 : index
    %c0_111 = arith.constant 0 : index
    %333 = vector.load %arg18[%332, %c0_110, %c0_111] : memref<8x2x128xf32, #tpu.memory_space<vmem>>, vector<1x2x128xf32>
    %334 = vector.shape_cast %333 : vector<1x2x128xf32> to vector<2x128xf32>
    %cst_112 = arith.constant dense<0.000000e+00> : vector<2x128xf32>
    %335 = tpu.matmul %327, %295, %cst_112 {dimension_numbers = #tpu.dot_dimension_numbers<[1], [0], [0], [1], [0, 0, 1, 1], [], []>} : vector<2x32xf32>, vector<32x128xf32>, vector<2x128xf32> -> vector<2x128xf32>
    %336 = arith.addf %334, %335 : vector<2x128xf32>
    %337 = vector.extract_strided_slice %336 {offsets = [0, 0], sizes = [2, 32], strides = [1, 1]} : vector<2x128xf32> to vector<2x32xf32>
    %338 = arith.negf %337 : vector<2x32xf32>
    %339 = math.exp %338 : vector<2x32xf32>
    %cst_113 = arith.constant 1.000000e+00 : f32
    %340 = vector.broadcast %cst_113 : f32 to vector<2x32xf32>
    %341 = arith.addf %340, %339 : vector<2x32xf32>
    %342 = arith.divf %340, %341 : vector<2x32xf32>
    %343 = vector.extract_strided_slice %336 {offsets = [0, 32], sizes = [2, 32], strides = [1, 1]} : vector<2x128xf32> to vector<2x32xf32>
    %344 = math.tanh %343 : vector<2x32xf32>
    %345 = vector.extract_strided_slice %336 {offsets = [0, 64], sizes = [2, 32], strides = [1, 1]} : vector<2x128xf32> to vector<2x32xf32>
    %346 = arith.negf %345 : vector<2x32xf32>
    %347 = math.exp %346 : vector<2x32xf32>
    %cst_114 = arith.constant 1.000000e+00 : f32
    %348 = vector.broadcast %cst_114 : f32 to vector<2x32xf32>
    %349 = arith.addf %348, %347 : vector<2x32xf32>
    %350 = arith.divf %348, %349 : vector<2x32xf32>
    %351 = vector.extract_strided_slice %336 {offsets = [0, 96], sizes = [2, 32], strides = [1, 1]} : vector<2x128xf32> to vector<2x32xf32>
    %352 = arith.negf %351 : vector<2x32xf32>
    %353 = math.exp %352 : vector<2x32xf32>
    %cst_115 = arith.constant 1.000000e+00 : f32
    %354 = vector.broadcast %cst_115 : f32 to vector<2x32xf32>
    %355 = arith.addf %354, %353 : vector<2x32xf32>
    %356 = arith.divf %354, %355 : vector<2x32xf32>
    %357 = arith.mulf %356, %325 : vector<2x32xf32>
    %358 = arith.mulf %350, %344 : vector<2x32xf32>
    %359 = arith.addf %357, %358 : vector<2x32xf32>
    %360 = math.tanh %359 : vector<2x32xf32>
    %361 = arith.mulf %342, %360 : vector<2x32xf32>
    %362 = arith.index_cast %c1_i32_109 : i32 to index
    %c0_116 = arith.constant 0 : index
    %c0_117 = arith.constant 0 : index
    %363 = vector.load %arg14[%362, %c0_116, %c0_117] : memref<8x2x32xf32, #tpu.memory_space<vmem>>, vector<1x2x32xf32>
    %364 = vector.shape_cast %363 : vector<1x2x32xf32> to vector<2x32xf32>
    %365 = vector.shape_cast %361 : vector<2x32xf32> to vector<1x2x32xf32>
    tpu.vector_store %arg14[%362, %c0_116, %c0_117], %365 {strides = array<i32>} : memref<8x2x32xf32, #tpu.memory_space<vmem>>, vector<1x2x32xf32>,
    %c2_i32_118 = arith.constant 2 : i32
    %366 = arith.index_cast %c2_i32_118 : i32 to index
    %c0_119 = arith.constant 0 : index
    %c0_120 = arith.constant 0 : index
    %367 = vector.load %arg18[%366, %c0_119, %c0_120] : memref<8x2x128xf32, #tpu.memory_space<vmem>>, vector<1x2x128xf32>
    %368 = vector.shape_cast %367 : vector<1x2x128xf32> to vector<2x128xf32>
    %cst_121 = arith.constant dense<0.000000e+00> : vector<2x128xf32>
    %369 = tpu.matmul %361, %295, %cst_121 {dimension_numbers = #tpu.dot_dimension_numbers<[1], [0], [0], [1], [0, 0, 1, 1], [], []>} : vector<2x32xf32>, vector<32x128xf32>, vector<2x128xf32> -> vector<2x128xf32>
    %370 = arith.addf %368, %369 : vector<2x128xf32>
    %371 = vector.extract_strided_slice %370 {offsets = [0, 0], sizes = [2, 32], strides = [1, 1]} : vector<2x128xf32> to vector<2x32xf32>
    %372 = arith.negf %371 : vector<2x32xf32>
    %373 = math.exp %372 : vector<2x32xf32>
    %cst_122 = arith.constant 1.000000e+00 : f32
    %374 = vector.broadcast %cst_122 : f32 to vector<2x32xf32>
    %375 = arith.addf %374, %373 : vector<2x32xf32>
    %376 = arith.divf %374, %375 : vector<2x32xf32>
    %377 = vector.extract_strided_slice %370 {offsets = [0, 32], sizes = [2, 32], strides = [1, 1]} : vector<2x128xf32> to vector<2x32xf32>
    %378 = math.tanh %377 : vector<2x32xf32>
    %379 = vector.extract_strided_slice %370 {offsets = [0, 64], sizes = [2, 32], strides = [1, 1]} : vector<2x128xf32> to vector<2x32xf32>
    %380 = arith.negf %379 : vector<2x32xf32>
    %381 = math.exp %380 : vector<2x32xf32>
    %cst_123 = arith.constant 1.000000e+00 : f32
    %382 = vector.broadcast %cst_123 : f32 to vector<2x32xf32>
    %383 = arith.addf %382, %381 : vector<2x32xf32>
    %384 = arith.divf %382, %383 : vector<2x32xf32>
    %385 = vector.extract_strided_slice %370 {offsets = [0, 96], sizes = [2, 32], strides = [1, 1]} : vector<2x128xf32> to vector<2x32xf32>
    %386 = arith.negf %385 : vector<2x32xf32>
    %387 = math.exp %386 : vector<2x32xf32>
    %cst_124 = arith.constant 1.000000e+00 : f32
    %388 = vector.broadcast %cst_124 : f32 to vector<2x32xf32>
    %389 = arith.addf %388, %387 : vector<2x32xf32>
    %390 = arith.divf %388, %389 : vector<2x32xf32>
    %391 = arith.mulf %390, %359 : vector<2x32xf32>
    %392 = arith.mulf %384, %378 : vector<2x32xf32>
    %393 = arith.addf %391, %392 : vector<2x32xf32>
    %394 = math.tanh %393 : vector<2x32xf32>
    %395 = arith.mulf %376, %394 : vector<2x32xf32>
    %396 = arith.index_cast %c2_i32_118 : i32 to index
    %c0_125 = arith.constant 0 : index
    %c0_126 = arith.constant 0 : index
    %397 = vector.load %arg14[%396, %c0_125, %c0_126] : memref<8x2x32xf32, #tpu.memory_space<vmem>>, vector<1x2x32xf32>
    %398 = vector.shape_cast %397 : vector<1x2x32xf32> to vector<2x32xf32>
    %399 = vector.shape_cast %395 : vector<2x32xf32> to vector<1x2x32xf32>
    tpu.vector_store %arg14[%396, %c0_125, %c0_126], %399 {strides = array<i32>} : memref<8x2x32xf32, #tpu.memory_space<vmem>>, vector<1x2x32xf32>,
    %c3_i32_127 = arith.constant 3 : i32
    %400 = arith.index_cast %c3_i32_127 : i32 to index
    %c0_128 = arith.constant 0 : index
    %c0_129 = arith.constant 0 : index
    %401 = vector.load %arg18[%400, %c0_128, %c0_129] : memref<8x2x128xf32, #tpu.memory_space<vmem>>, vector<1x2x128xf32>
    %402 = vector.shape_cast %401 : vector<1x2x128xf32> to vector<2x128xf32>
    %cst_130 = arith.constant dense<0.000000e+00> : vector<2x128xf32>
    %403 = tpu.matmul %395, %295, %cst_130 {dimension_numbers = #tpu.dot_dimension_numbers<[1], [0], [0], [1], [0, 0, 1, 1], [], []>} : vector<2x32xf32>, vector<32x128xf32>, vector<2x128xf32> -> vector<2x128xf32>
    %404 = arith.addf %402, %403 : vector<2x128xf32>
    %405 = vector.extract_strided_slice %404 {offsets = [0, 0], sizes = [2, 32], strides = [1, 1]} : vector<2x128xf32> to vector<2x32xf32>
    %406 = arith.negf %405 : vector<2x32xf32>
    %407 = math.exp %406 : vector<2x32xf32>
    %cst_131 = arith.constant 1.000000e+00 : f32
    %408 = vector.broadcast %cst_131 : f32 to vector<2x32xf32>
    %409 = arith.addf %408, %407 : vector<2x32xf32>
    %410 = arith.divf %408, %409 : vector<2x32xf32>
    %411 = vector.extract_strided_slice %404 {offsets = [0, 32], sizes = [2, 32], strides = [1, 1]} : vector<2x128xf32> to vector<2x32xf32>
    %412 = math.tanh %411 : vector<2x32xf32>
    %413 = vector.extract_strided_slice %404 {offsets = [0, 64], sizes = [2, 32], strides = [1, 1]} : vector<2x128xf32> to vector<2x32xf32>
    %414 = arith.negf %413 : vector<2x32xf32>
    %415 = math.exp %414 : vector<2x32xf32>
    %cst_132 = arith.constant 1.000000e+00 : f32
    %416 = vector.broadcast %cst_132 : f32 to vector<2x32xf32>
    %417 = arith.addf %416, %415 : vector<2x32xf32>
    %418 = arith.divf %416, %417 : vector<2x32xf32>
    %419 = vector.extract_strided_slice %404 {offsets = [0, 96], sizes = [2, 32], strides = [1, 1]} : vector<2x128xf32> to vector<2x32xf32>
    %420 = arith.negf %419 : vector<2x32xf32>
    %421 = math.exp %420 : vector<2x32xf32>
    %cst_133 = arith.constant 1.000000e+00 : f32
    %422 = vector.broadcast %cst_133 : f32 to vector<2x32xf32>
    %423 = arith.addf %422, %421 : vector<2x32xf32>
    %424 = arith.divf %422, %423 : vector<2x32xf32>
    %425 = arith.mulf %424, %393 : vector<2x32xf32>
    %426 = arith.mulf %418, %412 : vector<2x32xf32>
    %427 = arith.addf %425, %426 : vector<2x32xf32>
    %428 = math.tanh %427 : vector<2x32xf32>
    %429 = arith.mulf %410, %428 : vector<2x32xf32>
    %430 = arith.index_cast %c3_i32_127 : i32 to index
    %c0_134 = arith.constant 0 : index
    %c0_135 = arith.constant 0 : index
    %431 = vector.load %arg14[%430, %c0_134, %c0_135] : memref<8x2x32xf32, #tpu.memory_space<vmem>>, vector<1x2x32xf32>
    %432 = vector.shape_cast %431 : vector<1x2x32xf32> to vector<2x32xf32>
    %433 = vector.shape_cast %429 : vector<2x32xf32> to vector<1x2x32xf32>
    tpu.vector_store %arg14[%430, %c0_134, %c0_135], %433 {strides = array<i32>} : memref<8x2x32xf32, #tpu.memory_space<vmem>>, vector<1x2x32xf32>,
    %c4_i32_136 = arith.constant 4 : i32
    %434 = arith.index_cast %c4_i32_136 : i32 to index
    %c0_137 = arith.constant 0 : index
    %c0_138 = arith.constant 0 : index
    %435 = vector.load %arg18[%434, %c0_137, %c0_138] : memref<8x2x128xf32, #tpu.memory_space<vmem>>, vector<1x2x128xf32>
    %436 = vector.shape_cast %435 : vector<1x2x128xf32> to vector<2x128xf32>
    %cst_139 = arith.constant dense<0.000000e+00> : vector<2x128xf32>
    %437 = tpu.matmul %429, %295, %cst_139 {dimension_numbers = #tpu.dot_dimension_numbers<[1], [0], [0], [1], [0, 0, 1, 1], [], []>} : vector<2x32xf32>, vector<32x128xf32>, vector<2x128xf32> -> vector<2x128xf32>
    %438 = arith.addf %436, %437 : vector<2x128xf32>
    %439 = vector.extract_strided_slice %438 {offsets = [0, 0], sizes = [2, 32], strides = [1, 1]} : vector<2x128xf32> to vector<2x32xf32>
    %440 = arith.negf %439 : vector<2x32xf32>
    %441 = math.exp %440 : vector<2x32xf32>
    %cst_140 = arith.constant 1.000000e+00 : f32
    %442 = vector.broadcast %cst_140 : f32 to vector<2x32xf32>
    %443 = arith.addf %442, %441 : vector<2x32xf32>
    %444 = arith.divf %442, %443 : vector<2x32xf32>
    %445 = vector.extract_strided_slice %438 {offsets = [0, 32], sizes = [2, 32], strides = [1, 1]} : vector<2x128xf32> to vector<2x32xf32>
    %446 = math.tanh %445 : vector<2x32xf32>
    %447 = vector.extract_strided_slice %438 {offsets = [0, 64], sizes = [2, 32], strides = [1, 1]} : vector<2x128xf32> to vector<2x32xf32>
    %448 = arith.negf %447 : vector<2x32xf32>
    %449 = math.exp %448 : vector<2x32xf32>
    %cst_141 = arith.constant 1.000000e+00 : f32
    %450 = vector.broadcast %cst_141 : f32 to vector<2x32xf32>
    %451 = arith.addf %450, %449 : vector<2x32xf32>
    %452 = arith.divf %450, %451 : vector<2x32xf32>
    %453 = vector.extract_strided_slice %438 {offsets = [0, 96], sizes = [2, 32], strides = [1, 1]} : vector<2x128xf32> to vector<2x32xf32>
    %454 = arith.negf %453 : vector<2x32xf32>
    %455 = math.exp %454 : vector<2x32xf32>
    %cst_142 = arith.constant 1.000000e+00 : f32
    %456 = vector.broadcast %cst_142 : f32 to vector<2x32xf32>
    %457 = arith.addf %456, %455 : vector<2x32xf32>
    %458 = arith.divf %456, %457 : vector<2x32xf32>
    %459 = arith.mulf %458, %427 : vector<2x32xf32>
    %460 = arith.mulf %452, %446 : vector<2x32xf32>
    %461 = arith.addf %459, %460 : vector<2x32xf32>
    %462 = math.tanh %461 : vector<2x32xf32>
    %463 = arith.mulf %444, %462 : vector<2x32xf32>
    %464 = arith.index_cast %c4_i32_136 : i32 to index
    %c0_143 = arith.constant 0 : index
    %c0_144 = arith.constant 0 : index
    %465 = vector.load %arg14[%464, %c0_143, %c0_144] : memref<8x2x32xf32, #tpu.memory_space<vmem>>, vector<1x2x32xf32>
    %466 = vector.shape_cast %465 : vector<1x2x32xf32> to vector<2x32xf32>
    %467 = vector.shape_cast %463 : vector<2x32xf32> to vector<1x2x32xf32>
    tpu.vector_store %arg14[%464, %c0_143, %c0_144], %467 {strides = array<i32>} : memref<8x2x32xf32, #tpu.memory_space<vmem>>, vector<1x2x32xf32>,
    %c5_i32_145 = arith.constant 5 : i32
    %468 = arith.index_cast %c5_i32_145 : i32 to index
    %c0_146 = arith.constant 0 : index
    %c0_147 = arith.constant 0 : index
    %469 = vector.load %arg18[%468, %c0_146, %c0_147] : memref<8x2x128xf32, #tpu.memory_space<vmem>>, vector<1x2x128xf32>
    %470 = vector.shape_cast %469 : vector<1x2x128xf32> to vector<2x128xf32>
    %cst_148 = arith.constant dense<0.000000e+00> : vector<2x128xf32>
    %471 = tpu.matmul %463, %295, %cst_148 {dimension_numbers = #tpu.dot_dimension_numbers<[1], [0], [0], [1], [0, 0, 1, 1], [], []>} : vector<2x32xf32>, vector<32x128xf32>, vector<2x128xf32> -> vector<2x128xf32>
    %472 = arith.addf %470, %471 : vector<2x128xf32>
    %473 = vector.extract_strided_slice %472 {offsets = [0, 0], sizes = [2, 32], strides = [1, 1]} : vector<2x128xf32> to vector<2x32xf32>
    %474 = arith.negf %473 : vector<2x32xf32>
    %475 = math.exp %474 : vector<2x32xf32>
    %cst_149 = arith.constant 1.000000e+00 : f32
    %476 = vector.broadcast %cst_149 : f32 to vector<2x32xf32>
    %477 = arith.addf %476, %475 : vector<2x32xf32>
    %478 = arith.divf %476, %477 : vector<2x32xf32>
    %479 = vector.extract_strided_slice %472 {offsets = [0, 32], sizes = [2, 32], strides = [1, 1]} : vector<2x128xf32> to vector<2x32xf32>
    %480 = math.tanh %479 : vector<2x32xf32>
    %481 = vector.extract_strided_slice %472 {offsets = [0, 64], sizes = [2, 32], strides = [1, 1]} : vector<2x128xf32> to vector<2x32xf32>
    %482 = arith.negf %481 : vector<2x32xf32>
    %483 = math.exp %482 : vector<2x32xf32>
    %cst_150 = arith.constant 1.000000e+00 : f32
    %484 = vector.broadcast %cst_150 : f32 to vector<2x32xf32>
    %485 = arith.addf %484, %483 : vector<2x32xf32>
    %486 = arith.divf %484, %485 : vector<2x32xf32>
    %487 = vector.extract_strided_slice %472 {offsets = [0, 96], sizes = [2, 32], strides = [1, 1]} : vector<2x128xf32> to vector<2x32xf32>
    %488 = arith.negf %487 : vector<2x32xf32>
    %489 = math.exp %488 : vector<2x32xf32>
    %cst_151 = arith.constant 1.000000e+00 : f32
    %490 = vector.broadcast %cst_151 : f32 to vector<2x32xf32>
    %491 = arith.addf %490, %489 : vector<2x32xf32>
    %492 = arith.divf %490, %491 : vector<2x32xf32>
    %493 = arith.mulf %492, %461 : vector<2x32xf32>
    %494 = arith.mulf %486, %480 : vector<2x32xf32>
    %495 = arith.addf %493, %494 : vector<2x32xf32>
    %496 = math.tanh %495 : vector<2x32xf32>
    %497 = arith.mulf %478, %496 : vector<2x32xf32>
    %498 = arith.index_cast %c5_i32_145 : i32 to index
    %c0_152 = arith.constant 0 : index
    %c0_153 = arith.constant 0 : index
    %499 = vector.load %arg14[%498, %c0_152, %c0_153] : memref<8x2x32xf32, #tpu.memory_space<vmem>>, vector<1x2x32xf32>
    %500 = vector.shape_cast %499 : vector<1x2x32xf32> to vector<2x32xf32>
    %501 = vector.shape_cast %497 : vector<2x32xf32> to vector<1x2x32xf32>
    tpu.vector_store %arg14[%498, %c0_152, %c0_153], %501 {strides = array<i32>} : memref<8x2x32xf32, #tpu.memory_space<vmem>>, vector<1x2x32xf32>,
    %c6_i32_154 = arith.constant 6 : i32
    %502 = arith.index_cast %c6_i32_154 : i32 to index
    %c0_155 = arith.constant 0 : index
    %c0_156 = arith.constant 0 : index
    %503 = vector.load %arg18[%502, %c0_155, %c0_156] : memref<8x2x128xf32, #tpu.memory_space<vmem>>, vector<1x2x128xf32>
    %504 = vector.shape_cast %503 : vector<1x2x128xf32> to vector<2x128xf32>
    %cst_157 = arith.constant dense<0.000000e+00> : vector<2x128xf32>
    %505 = tpu.matmul %497, %295, %cst_157 {dimension_numbers = #tpu.dot_dimension_numbers<[1], [0], [0], [1], [0, 0, 1, 1], [], []>} : vector<2x32xf32>, vector<32x128xf32>, vector<2x128xf32> -> vector<2x128xf32>
    %506 = arith.addf %504, %505 : vector<2x128xf32>
    %507 = vector.extract_strided_slice %506 {offsets = [0, 0], sizes = [2, 32], strides = [1, 1]} : vector<2x128xf32> to vector<2x32xf32>
    %508 = arith.negf %507 : vector<2x32xf32>
    %509 = math.exp %508 : vector<2x32xf32>
    %cst_158 = arith.constant 1.000000e+00 : f32
    %510 = vector.broadcast %cst_158 : f32 to vector<2x32xf32>
    %511 = arith.addf %510, %509 : vector<2x32xf32>
    %512 = arith.divf %510, %511 : vector<2x32xf32>
    %513 = vector.extract_strided_slice %506 {offsets = [0, 32], sizes = [2, 32], strides = [1, 1]} : vector<2x128xf32> to vector<2x32xf32>
    %514 = math.tanh %513 : vector<2x32xf32>
    %515 = vector.extract_strided_slice %506 {offsets = [0, 64], sizes = [2, 32], strides = [1, 1]} : vector<2x128xf32> to vector<2x32xf32>
    %516 = arith.negf %515 : vector<2x32xf32>
    %517 = math.exp %516 : vector<2x32xf32>
    %cst_159 = arith.constant 1.000000e+00 : f32
    %518 = vector.broadcast %cst_159 : f32 to vector<2x32xf32>
    %519 = arith.addf %518, %517 : vector<2x32xf32>
    %520 = arith.divf %518, %519 : vector<2x32xf32>
    %521 = vector.extract_strided_slice %506 {offsets = [0, 96], sizes = [2, 32], strides = [1, 1]} : vector<2x128xf32> to vector<2x32xf32>
    %522 = arith.negf %521 : vector<2x32xf32>
    %523 = math.exp %522 : vector<2x32xf32>
    %cst_160 = arith.constant 1.000000e+00 : f32
    %524 = vector.broadcast %cst_160 : f32 to vector<2x32xf32>
    %525 = arith.addf %524, %523 : vector<2x32xf32>
    %526 = arith.divf %524, %525 : vector<2x32xf32>
    %527 = arith.mulf %526, %495 : vector<2x32xf32>
    %528 = arith.mulf %520, %514 : vector<2x32xf32>
    %529 = arith.addf %527, %528 : vector<2x32xf32>
    %530 = math.tanh %529 : vector<2x32xf32>
    %531 = arith.mulf %512, %530 : vector<2x32xf32>
    %532 = arith.index_cast %c6_i32_154 : i32 to index
    %c0_161 = arith.constant 0 : index
    %c0_162 = arith.constant 0 : index
    %533 = vector.load %arg14[%532, %c0_161, %c0_162] : memref<8x2x32xf32, #tpu.memory_space<vmem>>, vector<1x2x32xf32>
    %534 = vector.shape_cast %533 : vector<1x2x32xf32> to vector<2x32xf32>
    %535 = vector.shape_cast %531 : vector<2x32xf32> to vector<1x2x32xf32>
    tpu.vector_store %arg14[%532, %c0_161, %c0_162], %535 {strides = array<i32>} : memref<8x2x32xf32, #tpu.memory_space<vmem>>, vector<1x2x32xf32>,
    %c7_i32_163 = arith.constant 7 : i32
    %536 = arith.index_cast %c7_i32_163 : i32 to index
    %c0_164 = arith.constant 0 : index
    %c0_165 = arith.constant 0 : index
    %537 = vector.load %arg18[%536, %c0_164, %c0_165] : memref<8x2x128xf32, #tpu.memory_space<vmem>>, vector<1x2x128xf32>
    %538 = vector.shape_cast %537 : vector<1x2x128xf32> to vector<2x128xf32>
    %cst_166 = arith.constant dense<0.000000e+00> : vector<2x128xf32>
    %539 = tpu.matmul %531, %295, %cst_166 {dimension_numbers = #tpu.dot_dimension_numbers<[1], [0], [0], [1], [0, 0, 1, 1], [], []>} : vector<2x32xf32>, vector<32x128xf32>, vector<2x128xf32> -> vector<2x128xf32>
    %540 = arith.addf %538, %539 : vector<2x128xf32>
    %541 = vector.extract_strided_slice %540 {offsets = [0, 0], sizes = [2, 32], strides = [1, 1]} : vector<2x128xf32> to vector<2x32xf32>
    %542 = arith.negf %541 : vector<2x32xf32>
    %543 = math.exp %542 : vector<2x32xf32>
    %cst_167 = arith.constant 1.000000e+00 : f32
    %544 = vector.broadcast %cst_167 : f32 to vector<2x32xf32>
    %545 = arith.addf %544, %543 : vector<2x32xf32>
    %546 = arith.divf %544, %545 : vector<2x32xf32>
    %547 = vector.extract_strided_slice %540 {offsets = [0, 32], sizes = [2, 32], strides = [1, 1]} : vector<2x128xf32> to vector<2x32xf32>
    %548 = math.tanh %547 : vector<2x32xf32>
    %549 = vector.extract_strided_slice %540 {offsets = [0, 64], sizes = [2, 32], strides = [1, 1]} : vector<2x128xf32> to vector<2x32xf32>
    %550 = arith.negf %549 : vector<2x32xf32>
    %551 = math.exp %550 : vector<2x32xf32>
    %cst_168 = arith.constant 1.000000e+00 : f32
    %552 = vector.broadcast %cst_168 : f32 to vector<2x32xf32>
    %553 = arith.addf %552, %551 : vector<2x32xf32>
    %554 = arith.divf %552, %553 : vector<2x32xf32>
    %555 = vector.extract_strided_slice %540 {offsets = [0, 96], sizes = [2, 32], strides = [1, 1]} : vector<2x128xf32> to vector<2x32xf32>
    %556 = arith.negf %555 : vector<2x32xf32>
    %557 = math.exp %556 : vector<2x32xf32>
    %cst_169 = arith.constant 1.000000e+00 : f32
    %558 = vector.broadcast %cst_169 : f32 to vector<2x32xf32>
    %559 = arith.addf %558, %557 : vector<2x32xf32>
    %560 = arith.divf %558, %559 : vector<2x32xf32>
    %561 = arith.mulf %560, %529 : vector<2x32xf32>
    %562 = arith.mulf %554, %548 : vector<2x32xf32>
    %563 = arith.addf %561, %562 : vector<2x32xf32>
    %564 = math.tanh %563 : vector<2x32xf32>
    %565 = arith.mulf %546, %564 : vector<2x32xf32>
    %566 = arith.index_cast %c7_i32_163 : i32 to index
    %c0_170 = arith.constant 0 : index
    %c0_171 = arith.constant 0 : index
    %567 = vector.load %arg14[%566, %c0_170, %c0_171] : memref<8x2x32xf32, #tpu.memory_space<vmem>>, vector<1x2x32xf32>
    %568 = vector.shape_cast %567 : vector<1x2x32xf32> to vector<2x32xf32>
    %569 = vector.shape_cast %565 : vector<2x32xf32> to vector<1x2x32xf32>
    tpu.vector_store %arg14[%566, %c0_170, %c0_171], %569 {strides = array<i32>} : memref<8x2x32xf32, #tpu.memory_space<vmem>>, vector<1x2x32xf32>,
    %c8_i32_172 = arith.constant 8 : i32
    %c0_173 = arith.constant 0 : index
    %c0_174 = arith.constant 0 : index
    %570 = vector.load %arg15[%c0_173, %c0_174] : memref<2x32xf32, #tpu.memory_space<vmem>>, vector<2x32xf32>
    tpu.vector_store %arg15[%c0_173, %c0_174], %565 {strides = array<i32>} : memref<2x32xf32, #tpu.memory_space<vmem>>, vector<2x32xf32>,
    %c0_175 = arith.constant 0 : index
    %c0_176 = arith.constant 0 : index
    %571 = vector.load %arg16[%c0_175, %c0_176] : memref<2x32xf32, #tpu.memory_space<vmem>>, vector<2x32xf32>
    tpu.vector_store %arg16[%c0_175, %c0_176], %563 {strides = array<i32>} : memref<2x32xf32, #tpu.memory_space<vmem>>, vector<2x32xf32>,
    return
  }
}

</mosaic_0001>

<llo_original>
// kernel: tpu_custom_call.1
$region0: #{tpu_custom_call.1}
  #allocation0 [shape = 'u32[]', space=smem, size = 0x4, offset = 0x4, fixed_abs, tag = 'smem constant byte address 0x4 - core index']
  #allocation1 [shape = 'u32[72,128]{1,0:T(1,128)}', space=vmem, size = 0x9000, scoped, tag = 'internal scratch']
  #allocation2 [shape = 'f32[8,2,128]{2,1,0:T(2,128)}', space=vmem, size = 0x2000, scoped, tag = 'scratch operand']
  #allocation3 [shape = 'f32[8,2,128]{2,1,0:T(2,128)}', space=vmem, size = 0x2000, scoped, tag = 'scratch operand']
  %s0 = inlined_call_operand.hbm [shape: f32[8,2,16], index: 0, kind: input, shape index: {}]
  %s1 = inlined_call_operand.hbm [shape: f32[16,128], index: 1, kind: input, shape index: {}]
  %s2 = inlined_call_operand.hbm [shape: f32[1,128], index: 2, kind: input, shape index: {}]
  %s3 = inlined_call_operand.hbm [shape: f32[32,128], index: 3, kind: input, shape index: {}]
  %s4 = inlined_call_operand.vmem [shape: f32[2,32], index: 4, kind: input, shape index: {}]
  %s5 = inlined_call_operand.vmem [shape: f32[2,32], index: 5, kind: input, shape index: {}]
  %s6 = inlined_call_operand.hbm [shape: f32[32,128], index: 6, kind: input, shape index: {}]
  %s7 = inlined_call_operand.hbm [shape: f32[1,128], index: 7, kind: input, shape index: {}]
  %s8 = inlined_call_operand.hbm [shape: f32[32,128], index: 8, kind: input, shape index: {}]
  %s9 = inlined_call_operand.vmem [shape: f32[2,32], index: 9, kind: input, shape index: {}]
  %s10 = inlined_call_operand.vmem [shape: f32[2,32], index: 10, kind: input, shape index: {}]
  %s11 = inlined_call_operand.hbm [shape: f32[8,2,32], index: 11, kind: output, shape index: {0}]
  %s12 = inlined_call_operand.hbm [shape: f32[2,32], index: 12, kind: output, shape index: {1}]
  %s13 = inlined_call_operand.hbm [shape: f32[2,32], index: 13, kind: output, shape index: {2}]
  %s14 = inlined_call_operand.hbm [shape: f32[8,2,32], index: 14, kind: output, shape index: {3}]
  %s15 = inlined_call_operand.hbm [shape: f32[2,32], index: 15, kind: output, shape index: {4}]
  %s16 = inlined_call_operand.hbm [shape: f32[2,32], index: 16, kind: output, shape index: {5}]
  %17 = xla_tuple %s11, %s12, %s13, %s14, %s15, %s16
  %s18 = sld [smem:[#allocation0]]
  $region122: #{tpu_custom_call.1} parent=0
    _
  %s20 = ssub.s32 1, %s18
  %s21 = scalar_select 0, %s20, %s18
  $region1: #{tpu_custom_call.1} parent=0
    #allocation4 [shape = 'u8[8192]{0}', space=vmem, size = 0x2000, scoped, tag = 'input window, operand 0, single buffered']
    #allocation5 [shape = 's32[1]{0}', space=sflag, size = 0x4, scoped, tag = 'scoped memory for tpu_custom_call.1']
    #allocation6 [shape = 's32[1]{0}', space=sflag, size = 0x4, scoped, tag = 'scoped memory for tpu_custom_call.1']
    #allocation7 [shape = 'u8[8192]{0}', space=vmem, size = 0x2000, scoped, tag = 'input window, operand 1, single buffered']
    #allocation8 [shape = 's32[1]{0}', space=sflag, size = 0x4, scoped, tag = 'scoped memory for tpu_custom_call.1']
    #allocation9 [shape = 'u8[512]{0}', space=vmem, size = 0x400, scoped, tag = 'input window, operand 2, single buffered']
    #allocation10 [shape = 'u8[16384]{0}', space=vmem, size = 0x4000, scoped, tag = 'input window, operand 3, single buffered']
    #allocation11 [shape = 's32[1]{0}', space=sflag, size = 0x4, scoped, tag = 'scoped memory for tpu_custom_call.1']
    #allocation12 [shape = 'u8[16384]{0}', space=vmem, size = 0x4000, scoped, tag = 'input window, operand 6, single buffered']
    #allocation13 [shape = 'u8[512]{0}', space=vmem, size = 0x400, scoped, tag = 'input window, operand 7, single buffered']
    #allocation14 [shape = 's32[1]{0}', space=sflag, size = 0x4, scoped, tag = 'scoped memory for tpu_custom_call.1']
    #allocation15 [shape = 'u8[16384]{0}', space=vmem, size = 0x4000, scoped, tag = 'input window, operand 8, single buffered']
    #allocation16 [shape = 'u8[8192]{0}', space=vmem, size = 0x2000, scoped, tag = 'output window, operand 0, single buffered']
    #allocation17 [shape = 'u8[1024]{0}', space=vmem, size = 0x400, scoped, tag = 'output window, operand 1, single buffered']
    #allocation18 [shape = 's32[1]{0}', space=sflag, size = 0x4, scoped, tag = 'scoped memory for tpu_custom_call.1']
    #allocation19 [shape = 'u8[1024]{0}', space=vmem, size = 0x400, scoped, tag = 'output window, operand 2, single buffered']
    #allocation20 [shape = 'u8[8192]{0}', space=vmem, size = 0x2000, scoped, tag = 'output window, operand 3, single buffered']
    #allocation21 [shape = 's32[1]{0}', space=sflag, size = 0x4, scoped, tag = 'scoped memory for tpu_custom_call.1']
    #allocation22 [shape = 'u8[1024]{0}', space=vmem, size = 0x400, scoped, tag = 'output window, operand 4, single buffered']
    #allocation23 [shape = 'u8[1024]{0}', space=vmem, size = 0x400, scoped, tag = 'output window, operand 5, single buffered']
    #allocation24 [shape = 's32[1]{0}', space=sflag, size = 0x4, scoped, tag = 'scoped memory for tpu_custom_call.1']
    %22 = vsyncpa [#allocation5], 0
    %23 = vsyncpa [#allocation8], 0
    %24 = vsyncpa [#allocation11], 0
    %25 = vsyncpa [#allocation14], 0
    %26 = vsyncpa [#allocation6], 0
    %27 = vsyncpa [#allocation18], 0
    %28 = vsyncpa [#allocation21], 0
    %29 = vsyncpa [#allocation24], 0
    // Predicated region
    $region2: #{tpu_custom_call.1} parent=1 // pred_check
      _
    $region3: #{tpu_custom_call.1} parent=1 // pred_check_branch
      %31 = sbr.rel (0) target = $region5
    $region4: #{tpu_custom_call.1} parent=1 // pred_region
      %33 = vsyncadd [#allocation5], 0
      %s34 = sshll.u32 %s0, 4
      %s35 = int_to_ptr.hbm [resolvable:$true] %s34
      %s36 = sshll.u32 [#allocation4], 4
      %s37 = int_to_ptr.vmem [resolvable:$true] %s36
      %42 = dma.hbm_to_vmem [thread:$0]  %s35, 256, %s37, [#allocation5], 32, 32, 2
    $region5: #{tpu_custom_call.1} parent=1 // pred_fallthru
      _
    // Predicated region
    $region6: #{tpu_custom_call.1} parent=1 // pred_check
      _
    $region7: #{tpu_custom_call.1} parent=1 // pred_check_branch
      %44 = sbr.rel (0) target = $region9
    $region8: #{tpu_custom_call.1} parent=1 // pred_region
      %46 = vsyncadd [#allocation8], 0
      %s47 = sshll.u32 %s1, 4
      %s48 = int_to_ptr.hbm [resolvable:$true] %s47
      %s49 = sshll.u32 [#allocation7], 4
      %s50 = int_to_ptr.vmem [resolvable:$true] %s49
      %55 = dma.hbm_to_vmem [thread:$0]  %s48, 256, %s50, [#allocation8], 128, 128, 8
    $region9: #{tpu_custom_call.1} parent=1 // pred_fallthru
      _
    // Predicated region
    $region10: #{tpu_custom_call.1} parent=1 // pred_check
      _
    $region11: #{tpu_custom_call.1} parent=1 // pred_check_branch
      %57 = sbr.rel (0) target = $region13
    $region12: #{tpu_custom_call.1} parent=1 // pred_region
      %59 = vsyncadd [#allocation8], 0
      %s61 = sshll.u32 %s2, 4
      %s62 = int_to_ptr.hbm [resolvable:$true] %s61
      %s63 = sshll.u32 [#allocation9], 4
      %s64 = int_to_ptr.vmem [resolvable:$true] %s63
      %66 = dma.hbm_to_vmem [thread:$0]  %s62, 16, %s64, [#allocation8]
    $region13: #{tpu_custom_call.1} parent=1 // pred_fallthru
      _
    // Predicated region
    $region14: #{tpu_custom_call.1} parent=1 // pred_check
      _
    $region15: #{tpu_custom_call.1} parent=1 // pred_check_branch
      %68 = sbr.rel (0) target = $region17
    $region16: #{tpu_custom_call.1} parent=1 // pred_region
      %70 = vsyncadd [#allocation11], 0
      %s71 = sshll.u32 %s3, 4
      %s72 = int_to_ptr.hbm [resolvable:$true] %s71
      %s73 = sshll.u32 [#allocation10], 4
      %s74 = int_to_ptr.vmem [resolvable:$true] %s73
      %79 = dma.hbm_to_vmem [thread:$0]  %s72, 512, %s74, [#allocation11], 128, 128, 8
    $region17: #{tpu_custom_call.1} parent=1 // pred_fallthru
      _
    // Predicated region
    $region18: #{tpu_custom_call.1} parent=1 // pred_check
      _
    $region19: #{tpu_custom_call.1} parent=1 // pred_check_branch
      %81 = sbr.rel (0) target = $region21
    $region20: #{tpu_custom_call.1} parent=1 // pred_region
      _
    $region21: #{tpu_custom_call.1} parent=1 // pred_fallthru
      _
    // Predicated region
    $region22: #{tpu_custom_call.1} parent=1 // pred_check
      _
    $region23: #{tpu_custom_call.1} parent=1 // pred_check_branch
      %83 = sbr.rel (0) target = $region25
    $region24: #{tpu_custom_call.1} parent=1 // pred_region
      _
    $region25: #{tpu_custom_call.1} parent=1 // pred_fallthru
      _
    // Predicated region
    $region26: #{tpu_custom_call.1} parent=1 // pred_check
      _
    $region27: #{tpu_custom_call.1} parent=1 // pred_check_branch
      %85 = sbr.rel (0) target = $region29
    $region28: #{tpu_custom_call.1} parent=1 // pred_region
      %87 = vsyncadd [#allocation11], 0
      %s88 = sshll.u32 %s6, 4
      %s89 = int_to_ptr.hbm [resolvable:$true] %s88
      %s90 = sshll.u32 [#allocation12], 4
      %s91 = int_to_ptr.vmem [resolvable:$true] %s90
      %96 = dma.hbm_to_vmem [thread:$0]  %s89, 512, %s91, [#allocation11], 128, 128, 8
    $region29: #{tpu_custom_call.1} parent=1 // pred_fallthru
      _
    // Predicated region
    $region30: #{tpu_custom_call.1} parent=1 // pred_check
      _
    $region31: #{tpu_custom_call.1} parent=1 // pred_check_branch
      %98 = sbr.rel (0) target = $region33
    $region32: #{tpu_custom_call.1} parent=1 // pred_region
      %100 = vsyncadd [#allocation14], 0
      %s102 = sshll.u32 %s7, 4
      %s103 = int_to_ptr.hbm [resolvable:$true] %s102
      %s104 = sshll.u32 [#allocation13], 4
      %s105 = int_to_ptr.vmem [resolvable:$true] %s104
      %107 = dma.hbm_to_vmem [thread:$0]  %s103, 16, %s105, [#allocation14]
    $region33: #{tpu_custom_call.1} parent=1 // pred_fallthru
      _
    // Predicated region
    $region34: #{tpu_custom_call.1} parent=1 // pred_check
      _
    $region35: #{tpu_custom_call.1} parent=1 // pred_check_branch
      %109 = sbr.rel (0) target = $region37
    $region36: #{tpu_custom_call.1} parent=1 // pred_region
      %111 = vsyncadd [#allocation14], 0
      %s112 = sshll.u32 %s8, 4
      %s113 = int_to_ptr.hbm [resolvable:$true] %s112
      %s114 = sshll.u32 [#allocation15], 4
      %s115 = int_to_ptr.vmem [resolvable:$true] %s114
      %120 = dma.hbm_to_vmem [thread:$0]  %s113, 512, %s115, [#allocation14], 128, 128, 8
    $region37: #{tpu_custom_call.1} parent=1 // pred_fallthru
      _
    // Predicated region
    $region38: #{tpu_custom_call.1} parent=1 // pred_check
      _
    $region39: #{tpu_custom_call.1} parent=1 // pred_check_branch
      %122 = sbr.rel (0) target = $region41
    $region40: #{tpu_custom_call.1} parent=1 // pred_region
      _
    $region41: #{tpu_custom_call.1} parent=1 // pred_fallthru
      _
    // Predicated region
    $region42: #{tpu_custom_call.1} parent=1 // pred_check
      _
    $region43: #{tpu_custom_call.1} parent=1 // pred_check_branch
      %124 = sbr.rel (0) target = $region45
    $region44: #{tpu_custom_call.1} parent=1 // pred_region
      _
    $region45: #{tpu_custom_call.1} parent=1 // pred_fallthru
      _
    // Predicated region
    $region46: #{tpu_custom_call.1} parent=1 // pred_check
      _
    $region47: #{tpu_custom_call.1} parent=1 // pred_check_branch
      %126 = sbr.rel (0) target = $region49
    $region48: #{tpu_custom_call.1} parent=1 // pred_region
      %128 = dma.done [#allocation5], 256
    $region49: #{tpu_custom_call.1} parent=1 // pred_fallthru
      _
    // Predicated region
    $region50: #{tpu_custom_call.1} parent=1 // pred_check
      _
    $region51: #{tpu_custom_call.1} parent=1 // pred_check_branch
      %130 = sbr.rel (0) target = $region53
    $region52: #{tpu_custom_call.1} parent=1 // pred_region
      %132 = dma.done [#allocation8], 256
    $region53: #{tpu_custom_call.1} parent=1 // pred_fallthru
      _
    // Predicated region
    $region54: #{tpu_custom_call.1} parent=1 // pred_check
      _
    $region55: #{tpu_custom_call.1} parent=1 // pred_check_branch
      %134 = sbr.rel (0) target = $region57
    $region56: #{tpu_custom_call.1} parent=1 // pred_region
      %136 = dma.done [#allocation8], 16
    $region57: #{tpu_custom_call.1} parent=1 // pred_fallthru
      _
    // Predicated region
    $region58: #{tpu_custom_call.1} parent=1 // pred_check
      _
    $region59: #{tpu_custom_call.1} parent=1 // pred_check_branch
      %138 = sbr.rel (0) target = $region61
    $region60: #{tpu_custom_call.1} parent=1 // pred_region
      %140 = dma.done [#allocation11], 512
    $region61: #{tpu_custom_call.1} parent=1 // pred_fallthru
      _
    // Predicated region
    $region62: #{tpu_custom_call.1} parent=1 // pred_check
      _
    $region63: #{tpu_custom_call.1} parent=1 // pred_check_branch
      %142 = sbr.rel (0) target = $region65
    $region64: #{tpu_custom_call.1} parent=1 // pred_region
      %144 = dma.done [#allocation11], 512
    $region65: #{tpu_custom_call.1} parent=1 // pred_fallthru
      _
    // Predicated region
    $region66: #{tpu_custom_call.1} parent=1 // pred_check
      _
    $region67: #{tpu_custom_call.1} parent=1 // pred_check_branch
      %146 = sbr.rel (0) target = $region69
    $region68: #{tpu_custom_call.1} parent=1 // pred_region
      %148 = dma.done [#allocation14], 16
    $region69: #{tpu_custom_call.1} parent=1 // pred_fallthru
      _
    // Predicated region
    $region70: #{tpu_custom_call.1} parent=1 // pred_check
      _
    $region71: #{tpu_custom_call.1} parent=1 // pred_check_branch
      %150 = sbr.rel (0) target = $region73
    $region72: #{tpu_custom_call.1} parent=1 // pred_region
      %152 = dma.done [#allocation14], 512
    $region73: #{tpu_custom_call.1} parent=1 // pred_fallthru
      _
    %v153 = vld [vmem:[#allocation4] sm:$0x3]
    %v154 = vld [vmem:[#allocation4 + $0x2] sm:$0x3]
    %v155 = vld [vmem:[#allocation4 + $0x4] sm:$0x3]
    %v156 = vld [vmem:[#allocation4 + $0x6] sm:$0x3]
    %v157 = vld [vmem:[#allocation4 + $0x8] sm:$0x3]
    %v158 = vld [vmem:[#allocation4 + $0xa] sm:$0x3]
    %v159 = vld [vmem:[#allocation4 + $0xc] sm:$0x3]
    %v160 = vld [vmem:[#allocation4 + $0xe] sm:$0x3]
    %v161 = vld [vmem:[#allocation7] sm:$0xff]
    %v162 = vld [vmem:[#allocation7 + $0x8] sm:$0xff]
    %v163 = vld [vmem:[#allocation9] sm:$0x1]
    %v165 = vperm.slane %v163, 0
    %175 = vst [vmem:[#allocation1] ss:$4 sm:$0xff] %v153
    %s176 = scalar_lea.vmem [#allocation1], 1
    %177 = vst [vmem:[%s176] ss:$4 sm:$0xff] %v154
    %s178 = scalar_lea.vmem [#allocation1], 2
    %179 = vst [vmem:[%s178] ss:$4 sm:$0xff] %v155
    %s180 = scalar_lea.vmem [#allocation1], 3
    %181 = vst [vmem:[%s180] ss:$4 sm:$0xff] %v156
    %s182 = scalar_lea.vmem [#allocation1], 32
    %183 = vst [vmem:[%s182] ss:$4 sm:$0xff] %v157
    %s184 = scalar_lea.vmem [#allocation1], 33
    %185 = vst [vmem:[%s184] ss:$4 sm:$0xff] %v158
    %s186 = scalar_lea.vmem [#allocation1], 34
    %187 = vst [vmem:[%s186] ss:$4 sm:$0xff] %v159
    %s188 = scalar_lea.vmem [#allocation1], 35
    %189 = vst [vmem:[%s188] ss:$4 sm:$0xff] %v160
    %v190 = vld.sshfl [vmem:[#allocation1] sm:$0xff pattern:$0x73625140]
    %v191 = vld.sshfl [vmem:[#allocation1 + $0x20] sm:$0xff pattern:$0x73625140]
    %vm192 = vcmask 130048
    %v193 = vsel %vm192, %v190, 0
    %v195 = vsel %vm192, %v191, 0
    %197 = vmatpush.msra.mxu0 0.0
    %198 = vmatpush.msra.mxu0 0.0
    %199 = vmatpush.msra.mxu0 0.0
    %200 = vmatpush.msra.mxu0 0.0
    %201 = vmatpush.msra.mxu0 0.0
    %202 = vmatpush.msra.mxu0 0.0
    %203 = vmatpush.msra.mxu0 0.0
    %204 = vmatpush.msra.mxu0 0.0
    %205 = vmatpush.msra.mxu0 0.0
    %206 = vmatpush.msra.mxu0 0.0
    %207 = vmatpush.msra.mxu0 0.0
    %208 = vmatpush.msra.mxu0 0.0
    %209 = vmatpush.msra.mxu0 0.0
    %210 = vmatpush.msra.mxu0 0.0
    %211 = vmatpush.msra.mxu0 %v162
    %212 = vmatpush.msra.mxu0 %v161
    %213 = vmatmul.f32.gmra.mxu0 %v193
    %v214 = vpop.f32.mrf.mxu0
    %v215 = vadd.f32 %v165, %v214
    %216 = vmatmul.f32.gmra.mxu0 %v195
    %v217 = vpop.f32.mrf.mxu0
    %v218 = vadd.f32 %v165, %v217
    %219 = vdwg.mxu0
    %v222 = vrot.slane %v215, 2
    %v223 = vrot.slane %v215, 4
    %v224 = vrot.slane %v215, 6
    %v225 = vrot.slane %v218, 2
    %v226 = vrot.slane %v218, 4
    %v227 = vrot.slane %v218, 6
    %234 = vst [vmem:[#allocation2] sm:$0x3] %v215
    %235 = vst [vmem:[#allocation2 + $0x2] sm:$0x3] %v222
    %236 = vst [vmem:[#allocation2 + $0x4] sm:$0x3] %v223
    %237 = vst [vmem:[#allocation2 + $0x6] sm:$0x3] %v224
    %238 = vst [vmem:[#allocation2 + $0x8] sm:$0x3] %v218
    %239 = vst [vmem:[#allocation2 + $0xa] sm:$0x3] %v225
    %240 = vst [vmem:[#allocation2 + $0xc] sm:$0x3] %v226
    %241 = vst [vmem:[#allocation2 + $0xe] sm:$0x3] %v227
    %v242 = vld [vmem:[#allocation10] sm:$0xff]
    %v243 = vld [vmem:[#allocation10 + $0x8] sm:$0xff]
    %v244 = vld [vmem:[#allocation10 + $0x10] sm:$0xff]
    %v245 = vld [vmem:[#allocation10 + $0x18] sm:$0xff]
    %v246 = vld [vmem:[%s4] sm:$0x3]
    %v247 = vld [vmem:[%s5] sm:$0x3]
    %v248 = vld [vmem:[#allocation2] sm:$0x3]
    %vm249 = vcmask 261120
    %v251 = vsel %vm249, %v246, 0
    %253 = vmatpush.msra.mxu0 0.0
    %254 = vmatpush.msra.mxu0 0.0
    %255 = vmatpush.msra.mxu0 0.0
    %256 = vmatpush.msra.mxu0 0.0
    %257 = vmatpush.msra.mxu0 0.0
    %258 = vmatpush.msra.mxu0 0.0
    %259 = vmatpush.msra.mxu0 0.0
    %260 = vmatpush.msra.mxu0 0.0
    %261 = vmatpush.msra.mxu0 0.0
    %262 = vmatpush.msra.mxu0 0.0
    %263 = vmatpush.msra.mxu0 0.0
    %264 = vmatpush.msra.mxu0 0.0
    %265 = vmatpush.msra.mxu0 %v245
    %266 = vmatpush.msra.mxu0 %v244
    %267 = vmatpush.msra.mxu0 %v243
    %268 = vmatpush.msra.mxu0 %v242
    %269 = vmatmul.f32.gmra.mxu0 %v251
    %v270 = vpop.f32.mrf.mxu0
    %v271 = vadd.f32 0.0, %v270
    %272 = vdwg.mxu0
    %v273 = vadd.f32 %v248, %v271
    %v274 = vxor.u32 %v273, 2147483648
    %v275 = vmul.f32 %v274, 1.442695
    %v276 = vpow.pop %v275
    %v277 = vadd.f32 %v276, 1.0
    %v278 = vrcp.pop %v277
    %v279 = vmul.f32 %v277, %v278
    %v280 = vsub.f32 1.0, %v279
    %v281 = vmul.f32 %v278, %v280
    %v282 = vadd.f32 %v278, %v281
    %vm283 = vweird.f32 %v277
    %vm284 = vweird.f32 %v278
    %vm285 = vmor %vm283, %vm284
    %v286 = vsel %vm285, %v278, %v282
    %v287 = vand.u32 2147483647, %v277
    %vm288 = vcmp.eq.f32.partialorder %v287, 8.507059e+37
    %v289 = vand.u32 %v277, 2147483648
    %v290 = vor.u32 1.1754944e-38, %v289
    %v291 = vsel %vm288, %v290, %v286
    %v292 = vmul.f32 1.0, %v291
    %v293 = vtanh.pop %v273
    %295 = vrot.lane.b32.xlu0 %v247, 96
    %v296 = vpop.permute.xlu0 %295
    %v298 = vmul.f32 %v292, %v296
    %300 = vrot.lane.b32.xlu0 %v293, 32
    %v301 = vpop.permute.xlu0 %300
    %v303 = vmul.f32 %v292, %v301
    %305 = vrot.lane.b32.xlu0 %v303, 32
    %v306 = vpop.permute.xlu0 %305
    %v308 = vadd.f32 %v298, %v306
    %v309 = vtanh.pop %v308
    %311 = vrot.lane.b32.xlu0 %v309, 32
    %v312 = vpop.permute.xlu0 %311
    %v314 = vmul.f32 %v292, %v312
    %vm315 = vcmask 254976
    %316 = vst.msk [vmem:[#allocation16] sm:$0x3] %vm315, %v314
    %s317 = scalar_lea.vmem [#allocation2], 2
    %v318 = vld [vmem:[%s317] sm:$0x3]
    %v320 = vsel %vm249, %v314, 0
    %322 = vmatpush.msra.mxu0 0.0
    %323 = vmatpush.msra.mxu0 0.0
    %324 = vmatpush.msra.mxu0 0.0
    %325 = vmatpush.msra.mxu0 0.0
    %326 = vmatpush.msra.mxu0 0.0
    %327 = vmatpush.msra.mxu0 0.0
    %328 = vmatpush.msra.mxu0 0.0
    %329 = vmatpush.msra.mxu0 0.0
    %330 = vmatpush.msra.mxu0 0.0
    %331 = vmatpush.msra.mxu0 0.0
    %332 = vmatpush.msra.mxu0 0.0
    %333 = vmatpush.msra.mxu0 0.0
    %334 = vmatpush.msra.mxu0 %v245
    %335 = vmatpush.msra.mxu0 %v244
    %336 = vmatpush.msra.mxu0 %v243
    %337 = vmatpush.msra.mxu0 %v242
    %338 = vmatmul.f32.gmra.mxu0 %v320
    %v339 = vpop.f32.mrf.mxu0
    %v340 = vadd.f32 0.0, %v339
    %341 = vdwg.mxu0
    %v342 = vadd.f32 %v318, %v340
    %v343 = vxor.u32 %v342, 2147483648
    %v344 = vmul.f32 %v343, 1.442695
    %v345 = vpow.pop %v344
    %v346 = vadd.f32 %v345, 1.0
    %v347 = vrcp.pop %v346
    %v348 = vmul.f32 %v346, %v347
    %v349 = vsub.f32 1.0, %v348
    %v350 = vmul.f32 %v347, %v349
    %v351 = vadd.f32 %v347, %v350
    %vm352 = vweird.f32 %v346
    %vm353 = vweird.f32 %v347
    %vm354 = vmor %vm352, %vm353
    %v355 = vsel %vm354, %v347, %v351
    %v356 = vand.u32 2147483647, %v346
    %vm357 = vcmp.eq.f32.partialorder %v356, 8.507059e+37
    %v358 = vand.u32 %v346, 2147483648
    %v359 = vor.u32 1.1754944e-38, %v358
    %v360 = vsel %vm357, %v359, %v355
    %v361 = vmul.f32 1.0, %v360
    %v362 = vtanh.pop %v342
    %v363 = vmul.f32 %v361, %v308
    %365 = vrot.lane.b32.xlu0 %v362, 32
    %v366 = vpop.permute.xlu0 %365
    %v368 = vmul.f32 %v361, %v366
    %370 = vrot.lane.b32.xlu0 %v368, 32
    %v371 = vpop.permute.xlu0 %370
    %v373 = vadd.f32 %v363, %v371
    %v374 = vtanh.pop %v373
    %376 = vrot.lane.b32.xlu0 %v374, 32
    %v377 = vpop.permute.xlu0 %376
    %v379 = vmul.f32 %v361, %v377
    %s380 = scalar_lea.vmem [#allocation16], 2
    %381 = vst.msk [vmem:[%s380] sm:$0x3] %vm315, %v379
    %s382 = scalar_lea.vmem [#allocation2], 4
    %v383 = vld [vmem:[%s382] sm:$0x3]
    %v385 = vsel %vm249, %v379, 0
    %387 = vmatpush.msra.mxu0 0.0
    %388 = vmatpush.msra.mxu0 0.0
    %389 = vmatpush.msra.mxu0 0.0
    %390 = vmatpush.msra.mxu0 0.0
    %391 = vmatpush.msra.mxu0 0.0
    %392 = vmatpush.msra.mxu0 0.0
    %393 = vmatpush.msra.mxu0 0.0
    %394 = vmatpush.msra.mxu0 0.0
    %395 = vmatpush.msra.mxu0 0.0
    %396 = vmatpush.msra.mxu0 0.0
    %397 = vmatpush.msra.mxu0 0.0
    %398 = vmatpush.msra.mxu0 0.0
    %399 = vmatpush.msra.mxu0 %v245
    %400 = vmatpush.msra.mxu0 %v244
    %401 = vmatpush.msra.mxu0 %v243
    %402 = vmatpush.msra.mxu0 %v242
    %403 = vmatmul.f32.gmra.mxu0 %v385
    %v404 = vpop.f32.mrf.mxu0
    %v405 = vadd.f32 0.0, %v404
    %406 = vdwg.mxu0
    %v407 = vadd.f32 %v383, %v405
    %v408 = vxor.u32 %v407, 2147483648
    %v409 = vmul.f32 %v408, 1.442695
    %v410 = vpow.pop %v409
    %v411 = vadd.f32 %v410, 1.0
    %v412 = vrcp.pop %v411
    %v413 = vmul.f32 %v411, %v412
    %v414 = vsub.f32 1.0, %v413
    %v415 = vmul.f32 %v412, %v414
    %v416 = vadd.f32 %v412, %v415
    %vm417 = vweird.f32 %v411
    %vm418 = vweird.f32 %v412
    %vm419 = vmor %vm417, %vm418
    %v420 = vsel %vm419, %v412, %v416
    %v421 = vand.u32 2147483647, %v411
    %vm422 = vcmp.eq.f32.partialorder %v421, 8.507059e+37
    %v423 = vand.u32 %v411, 2147483648
    %v424 = vor.u32 1.1754944e-38, %v423
    %v425 = vsel %vm422, %v424, %v420
    %v426 = vmul.f32 1.0, %v425
    %v427 = vtanh.pop %v407
    %v428 = vmul.f32 %v426, %v373
    %430 = vrot.lane.b32.xlu0 %v427, 32
    %v431 = vpop.permute.xlu0 %430
    %v433 = vmul.f32 %v426, %v431
    %435 = vrot.lane.b32.xlu0 %v433, 32
    %v436 = vpop.permute.xlu0 %435
    %v438 = vadd.f32 %v428, %v436
    %v439 = vtanh.pop %v438
    %441 = vrot.lane.b32.xlu0 %v439, 32
    %v442 = vpop.permute.xlu0 %441
    %v444 = vmul.f32 %v426, %v442
    %s445 = scalar_lea.vmem [#allocation16], 4
    %446 = vst.msk [vmem:[%s445] sm:$0x3] %vm315, %v444
    %s447 = scalar_lea.vmem [#allocation2], 6
    %v448 = vld [vmem:[%s447] sm:$0x3]
    %v450 = vsel %vm249, %v444, 0
    %452 = vmatpush.msra.mxu0 0.0
    %453 = vmatpush.msra.mxu0 0.0
    %454 = vmatpush.msra.mxu0 0.0
    %455 = vmatpush.msra.mxu0 0.0
    %456 = vmatpush.msra.mxu0 0.0
    %457 = vmatpush.msra.mxu0 0.0
    %458 = vmatpush.msra.mxu0 0.0
    %459 = vmatpush.msra.mxu0 0.0
    %460 = vmatpush.msra.mxu0 0.0
    %461 = vmatpush.msra.mxu0 0.0
    %462 = vmatpush.msra.mxu0 0.0
    %463 = vmatpush.msra.mxu0 0.0
    %464 = vmatpush.msra.mxu0 %v245
    %465 = vmatpush.msra.mxu0 %v244
    %466 = vmatpush.msra.mxu0 %v243
    %467 = vmatpush.msra.mxu0 %v242
    %468 = vmatmul.f32.gmra.mxu0 %v450
    %v469 = vpop.f32.mrf.mxu0
    %v470 = vadd.f32 0.0, %v469
    %471 = vdwg.mxu0
    %v472 = vadd.f32 %v448, %v470
    %v473 = vxor.u32 %v472, 2147483648
    %v474 = vmul.f32 %v473, 1.442695
    %v475 = vpow.pop %v474
    %v476 = vadd.f32 %v475, 1.0
    %v477 = vrcp.pop %v476
    %v478 = vmul.f32 %v476, %v477
    %v479 = vsub.f32 1.0, %v478
    %v480 = vmul.f32 %v477, %v479
    %v481 = vadd.f32 %v477, %v480
    %vm482 = vweird.f32 %v476
    %vm483 = vweird.f32 %v477
    %vm484 = vmor %vm482, %vm483
    %v485 = vsel %vm484, %v477, %v481
    %v486 = vand.u32 2147483647, %v476
    %vm487 = vcmp.eq.f32.partialorder %v486, 8.507059e+37
    %v488 = vand.u32 %v476, 2147483648
    %v489 = vor.u32 1.1754944e-38, %v488
    %v490 = vsel %vm487, %v489, %v485
    %v491 = vmul.f32 1.0, %v490
    %v492 = vtanh.pop %v472
    %v493 = vmul.f32 %v491, %v438
    %495 = vrot.lane.b32.xlu0 %v492, 32
    %v496 = vpop.permute.xlu0 %495
    %v498 = vmul.f32 %v491, %v496
    %500 = vrot.lane.b32.xlu0 %v498, 32
    %v501 = vpop.permute.xlu0 %500
    %v503 = vadd.f32 %v493, %v501
    %v504 = vtanh.pop %v503
    %506 = vrot.lane.b32.xlu0 %v504, 32
    %v507 = vpop.permute.xlu0 %506
    %v509 = vmul.f32 %v491, %v507
    %s510 = scalar_lea.vmem [#allocation16], 6
    %511 = vst.msk [vmem:[%s510] sm:$0x3] %vm315, %v509
    %s512 = scalar_lea.vmem [#allocation2], 8
    %v513 = vld [vmem:[%s512] sm:$0x3]
    %v515 = vsel %vm249, %v509, 0
    %517 = vmatpush.msra.mxu0 0.0
    %518 = vmatpush.msra.mxu0 0.0
    %519 = vmatpush.msra.mxu0 0.0
    %520 = vmatpush.msra.mxu0 0.0
    %521 = vmatpush.msra.mxu0 0.0
    %522 = vmatpush.msra.mxu0 0.0
    %523 = vmatpush.msra.mxu0 0.0
    %524 = vmatpush.msra.mxu0 0.0
    %525 = vmatpush.msra.mxu0 0.0
    %526 = vmatpush.msra.mxu0 0.0
    %527 = vmatpush.msra.mxu0 0.0
    %528 = vmatpush.msra.mxu0 0.0
    %529 = vmatpush.msra.mxu0 %v245
    %530 = vmatpush.msra.mxu0 %v244
    %531 = vmatpush.msra.mxu0 %v243
    %532 = vmatpush.msra.mxu0 %v242
    %533 = vmatmul.f32.gmra.mxu0 %v515
    %v534 = vpop.f32.mrf.mxu0
    %v535 = vadd.f32 0.0, %v534
    %536 = vdwg.mxu0
    %v537 = vadd.f32 %v513, %v535
    %v538 = vxor.u32 %v537, 2147483648
    %v539 = vmul.f32 %v538, 1.442695
    %v540 = vpow.pop %v539
    %v541 = vadd.f32 %v540, 1.0
    %v542 = vrcp.pop %v541
    %v543 = vmul.f32 %v541, %v542
    %v544 = vsub.f32 1.0, %v543
    %v545 = vmul.f32 %v542, %v544
    %v546 = vadd.f32 %v542, %v545
    %vm547 = vweird.f32 %v541
    %vm548 = vweird.f32 %v542
    %vm549 = vmor %vm547, %vm548
    %v550 = vsel %vm549, %v542, %v546
    %v551 = vand.u32 2147483647, %v541
    %vm552 = vcmp.eq.f32.partialorder %v551, 8.507059e+37
    %v553 = vand.u32 %v541, 2147483648
    %v554 = vor.u32 1.1754944e-38, %v553
    %v555 = vsel %vm552, %v554, %v550
    %v556 = vmul.f32 1.0, %v555
    %v557 = vtanh.pop %v537
    %v558 = vmul.f32 %v556, %v503
    %560 = vrot.lane.b32.xlu0 %v557, 32
    %v561 = vpop.permute.xlu0 %560
    %v563 = vmul.f32 %v556, %v561
    %565 = vrot.lane.b32.xlu0 %v563, 32
    %v566 = vpop.permute.xlu0 %565
    %v568 = vadd.f32 %v558, %v566
    %v569 = vtanh.pop %v568
    %571 = vrot.lane.b32.xlu0 %v569, 32
    %v572 = vpop.permute.xlu0 %571
    %v574 = vmul.f32 %v556, %v572
    %s575 = scalar_lea.vmem [#allocation16], 8
    %576 = vst.msk [vmem:[%s575] sm:$0x3] %vm315, %v574
    %s577 = scalar_lea.vmem [#allocation2], 10
    %v578 = vld [vmem:[%s577] sm:$0x3]
    %v580 = vsel %vm249, %v574, 0
    %582 = vmatpush.msra.mxu0 0.0
    %583 = vmatpush.msra.mxu0 0.0
    %584 = vmatpush.msra.mxu0 0.0
    %585 = vmatpush.msra.mxu0 0.0
    %586 = vmatpush.msra.mxu0 0.0
    %587 = vmatpush.msra.mxu0 0.0
    %588 = vmatpush.msra.mxu0 0.0
    %589 = vmatpush.msra.mxu0 0.0
    %590 = vmatpush.msra.mxu0 0.0
    %591 = vmatpush.msra.mxu0 0.0
    %592 = vmatpush.msra.mxu0 0.0
    %593 = vmatpush.msra.mxu0 0.0
    %594 = vmatpush.msra.mxu0 %v245
    %595 = vmatpush.msra.mxu0 %v244
    %596 = vmatpush.msra.mxu0 %v243
    %597 = vmatpush.msra.mxu0 %v242
    %598 = vmatmul.f32.gmra.mxu0 %v580
    %v599 = vpop.f32.mrf.mxu0
    %v600 = vadd.f32 0.0, %v599
    %601 = vdwg.mxu0
    %v602 = vadd.f32 %v578, %v600
    %v603 = vxor.u32 %v602, 2147483648
    %v604 = vmul.f32 %v603, 1.442695
    %v605 = vpow.pop %v604
    %v606 = vadd.f32 %v605, 1.0
    %v607 = vrcp.pop %v606
    %v608 = vmul.f32 %v606, %v607
    %v609 = vsub.f32 1.0, %v608
    %v610 = vmul.f32 %v607, %v609
    %v611 = vadd.f32 %v607, %v610
    %vm612 = vweird.f32 %v606
    %vm613 = vweird.f32 %v607
    %vm614 = vmor %vm612, %vm613
    %v615 = vsel %vm614, %v607, %v611
    %v616 = vand.u32 2147483647, %v606
    %vm617 = vcmp.eq.f32.partialorder %v616, 8.507059e+37
    %v618 = vand.u32 %v606, 2147483648
    %v619 = vor.u32 1.1754944e-38, %v618
    %v620 = vsel %vm617, %v619, %v615
    %v621 = vmul.f32 1.0, %v620
    %v622 = vtanh.pop %v602
    %v623 = vmul.f32 %v621, %v568
    %625 = vrot.lane.b32.xlu0 %v622, 32
    %v626 = vpop.permute.xlu0 %625
    %v628 = vmul.f32 %v621, %v626
    %630 = vrot.lane.b32.xlu0 %v628, 32
    %v631 = vpop.permute.xlu0 %630
    %v633 = vadd.f32 %v623, %v631
    %v634 = vtanh.pop %v633
    %636 = vrot.lane.b32.xlu0 %v634, 32
    %v637 = vpop.permute.xlu0 %636
    %v639 = vmul.f32 %v621, %v637
    %s640 = scalar_lea.vmem [#allocation16], 10
    %641 = vst.msk [vmem:[%s640] sm:$0x3] %vm315, %v639
    %s642 = scalar_lea.vmem [#allocation2], 12
    %v643 = vld [vmem:[%s642] sm:$0x3]
    %v645 = vsel %vm249, %v639, 0
    %647 = vmatpush.msra.mxu0 0.0
    %648 = vmatpush.msra.mxu0 0.0
    %649 = vmatpush.msra.mxu0 0.0
    %650 = vmatpush.msra.mxu0 0.0
    %651 = vmatpush.msra.mxu0 0.0
    %652 = vmatpush.msra.mxu0 0.0
    %653 = vmatpush.msra.mxu0 0.0
    %654 = vmatpush.msra.mxu0 0.0
    %655 = vmatpush.msra.mxu0 0.0
    %656 = vmatpush.msra.mxu0 0.0
    %657 = vmatpush.msra.mxu0 0.0
    %658 = vmatpush.msra.mxu0 0.0
    %659 = vmatpush.msra.mxu0 %v245
    %660 = vmatpush.msra.mxu0 %v244
    %661 = vmatpush.msra.mxu0 %v243
    %662 = vmatpush.msra.mxu0 %v242
    %663 = vmatmul.f32.gmra.mxu0 %v645
    %v664 = vpop.f32.mrf.mxu0
    %v665 = vadd.f32 0.0, %v664
    %666 = vdwg.mxu0
    %v667 = vadd.f32 %v643, %v665
    %v668 = vxor.u32 %v667, 2147483648
    %v669 = vmul.f32 %v668, 1.442695
    %v670 = vpow.pop %v669
    %v671 = vadd.f32 %v670, 1.0
    %v672 = vrcp.pop %v671
    %v673 = vmul.f32 %v671, %v672
    %v674 = vsub.f32 1.0, %v673
    %v675 = vmul.f32 %v672, %v674
    %v676 = vadd.f32 %v672, %v675
    %vm677 = vweird.f32 %v671
    %vm678 = vweird.f32 %v672
    %vm679 = vmor %vm677, %vm678
    %v680 = vsel %vm679, %v672, %v676
    %v681 = vand.u32 2147483647, %v671
    %vm682 = vcmp.eq.f32.partialorder %v681, 8.507059e+37
    %v683 = vand.u32 %v671, 2147483648
    %v684 = vor.u32 1.1754944e-38, %v683
    %v685 = vsel %vm682, %v684, %v680
    %v686 = vmul.f32 1.0, %v685
    %v687 = vtanh.pop %v667
    %v688 = vmul.f32 %v686, %v633
    %690 = vrot.lane.b32.xlu0 %v687, 32
    %v691 = vpop.permute.xlu0 %690
    %v693 = vmul.f32 %v686, %v691
    %695 = vrot.lane.b32.xlu0 %v693, 32
    %v696 = vpop.permute.xlu0 %695
    %v698 = vadd.f32 %v688, %v696
    %v699 = vtanh.pop %v698
    %701 = vrot.lane.b32.xlu0 %v699, 32
    %v702 = vpop.permute.xlu0 %701
    %v704 = vmul.f32 %v686, %v702
    %s705 = scalar_lea.vmem [#allocation16], 12
    %706 = vst.msk [vmem:[%s705] sm:$0x3] %vm315, %v704
    %s707 = scalar_lea.vmem [#allocation2], 14
    %v708 = vld [vmem:[%s707] sm:$0x3]
    %v710 = vsel %vm249, %v704, 0
    %712 = vmatpush.msra.mxu0 0.0
    %713 = vmatpush.msra.mxu0 0.0
    %714 = vmatpush.msra.mxu0 0.0
    %715 = vmatpush.msra.mxu0 0.0
    %716 = vmatpush.msra.mxu0 0.0
    %717 = vmatpush.msra.mxu0 0.0
    %718 = vmatpush.msra.mxu0 0.0
    %719 = vmatpush.msra.mxu0 0.0
    %720 = vmatpush.msra.mxu0 0.0
    %721 = vmatpush.msra.mxu0 0.0
    %722 = vmatpush.msra.mxu0 0.0
    %723 = vmatpush.msra.mxu0 0.0
    %724 = vmatpush.msra.mxu0 %v245
    %725 = vmatpush.msra.mxu0 %v244
    %726 = vmatpush.msra.mxu0 %v243
    %727 = vmatpush.msra.mxu0 %v242
    %728 = vmatmul.f32.gmra.mxu0 %v710
    %v729 = vpop.f32.mrf.mxu0
    %v730 = vadd.f32 0.0, %v729
    %731 = vdwg.mxu0
    %v732 = vadd.f32 %v708, %v730
    %v733 = vxor.u32 %v732, 2147483648
    %v734 = vmul.f32 %v733, 1.442695
    %v735 = vpow.pop %v734
    %v736 = vadd.f32 %v735, 1.0
    %v737 = vrcp.pop %v736
    %v738 = vmul.f32 %v736, %v737
    %v739 = vsub.f32 1.0, %v738
    %v740 = vmul.f32 %v737, %v739
    %v741 = vadd.f32 %v737, %v740
    %vm742 = vweird.f32 %v736
    %vm743 = vweird.f32 %v737
    %vm744 = vmor %vm742, %vm743
    %v745 = vsel %vm744, %v737, %v741
    %v746 = vand.u32 2147483647, %v736
    %vm747 = vcmp.eq.f32.partialorder %v746, 8.507059e+37
    %v748 = vand.u32 %v736, 2147483648
    %v749 = vor.u32 1.1754944e-38, %v748
    %v750 = vsel %vm747, %v749, %v745
    %v751 = vmul.f32 1.0, %v750
    %v752 = vtanh.pop %v732
    %v753 = vmul.f32 %v751, %v698
    %755 = vrot.lane.b32.xlu0 %v752, 32
    %v756 = vpop.permute.xlu0 %755
    %v758 = vmul.f32 %v751, %v756
    %760 = vrot.lane.b32.xlu0 %v758, 32
    %v761 = vpop.permute.xlu0 %760
    %v763 = vadd.f32 %v753, %v761
    %v764 = vtanh.pop %v763
    %766 = vrot.lane.b32.xlu0 %v764, 32
    %v767 = vpop.permute.xlu0 %766
    %v769 = vmul.f32 %v751, %v767
    %s770 = scalar_lea.vmem [#allocation16], 14
    %771 = vst.msk [vmem:[%s770] sm:$0x3] %vm315, %v769
    %772 = vst.msk [vmem:[#allocation17] sm:$0x3] %vm315, %v769
    %774 = vrot.lane.b32.xlu0 %v763, 32
    %v775 = vpop.permute.xlu0 %774
    %777 = vst.msk [vmem:[#allocation19] sm:$0x3] %vm315, %v775
    %v778 = vld [vmem:[#allocation16] sm:$0x3]
    %v779 = vld [vmem:[#allocation16 + $0x2] sm:$0x3]
    %v780 = vld [vmem:[#allocation16 + $0x4] sm:$0x3]
    %v781 = vld [vmem:[#allocation16 + $0x6] sm:$0x3]
    %v782 = vld [vmem:[#allocation16 + $0x8] sm:$0x3]
    %v783 = vld [vmem:[#allocation16 + $0xa] sm:$0x3]
    %v784 = vld [vmem:[#allocation16 + $0xc] sm:$0x3]
    %v785 = vld [vmem:[#allocation16 + $0xe] sm:$0x3]
    %v786 = vld [vmem:[#allocation12] sm:$0xff]
    %v787 = vld [vmem:[#allocation12 + $0x8] sm:$0xff]
    %v788 = vld [vmem:[#allocation12 + $0x10] sm:$0xff]
    %v789 = vld [vmem:[#allocation12 + $0x18] sm:$0xff]
    %v790 = vld [vmem:[#allocation13] sm:$0x1]
    %v792 = vperm.slane %v790, 0
    %802 = vst [vmem:[#allocation1] ss:$4 sm:$0xff] %v778
    %s803 = scalar_lea.vmem [#allocation1], 1
    %804 = vst [vmem:[%s803] ss:$4 sm:$0xff] %v779
    %s805 = scalar_lea.vmem [#allocation1], 2
    %806 = vst [vmem:[%s805] ss:$4 sm:$0xff] %v780
    %s807 = scalar_lea.vmem [#allocation1], 3
    %808 = vst [vmem:[%s807] ss:$4 sm:$0xff] %v781
    %s809 = scalar_lea.vmem [#allocation1], 32
    %810 = vst [vmem:[%s809] ss:$4 sm:$0xff] %v782
    %s811 = scalar_lea.vmem [#allocation1], 33
    %812 = vst [vmem:[%s811] ss:$4 sm:$0xff] %v783
    %s813 = scalar_lea.vmem [#allocation1], 34
    %814 = vst [vmem:[%s813] ss:$4 sm:$0xff] %v784
    %s815 = scalar_lea.vmem [#allocation1], 35
    %816 = vst [vmem:[%s815] ss:$4 sm:$0xff] %v785
    %v817 = vld.sshfl [vmem:[#allocation1] sm:$0xff pattern:$0x73625140]
    %v818 = vld.sshfl [vmem:[#allocation1 + $0x20] sm:$0xff pattern:$0x73625140]
    %v819 = vsel %vm249, %v817, 0
    %v821 = vsel %vm249, %v818, 0
    %823 = vmatpush.msra.mxu0 0.0
    %824 = vmatpush.msra.mxu0 0.0
    %825 = vmatpush.msra.mxu0 0.0
    %826 = vmatpush.msra.mxu0 0.0
    %827 = vmatpush.msra.mxu0 0.0
    %828 = vmatpush.msra.mxu0 0.0
    %829 = vmatpush.msra.mxu0 0.0
    %830 = vmatpush.msra.mxu0 0.0
    %831 = vmatpush.msra.mxu0 0.0
    %832 = vmatpush.msra.mxu0 0.0
    %833 = vmatpush.msra.mxu0 0.0
    %834 = vmatpush.msra.mxu0 0.0
    %835 = vmatpush.msra.mxu0 %v789
    %836 = vmatpush.msra.mxu0 %v788
    %837 = vmatpush.msra.mxu0 %v787
    %838 = vmatpush.msra.mxu0 %v786
    %839 = vmatmul.f32.gmra.mxu0 %v819
    %v840 = vpop.f32.mrf.mxu0
    %v841 = vadd.f32 %v792, %v840
    %842 = vmatmul.f32.gmra.mxu0 %v821
    %v843 = vpop.f32.mrf.mxu0
    %v844 = vadd.f32 %v792, %v843
    %845 = vdwg.mxu0
    %v848 = vrot.slane %v841, 2
    %v849 = vrot.slane %v841, 4
    %v850 = vrot.slane %v841, 6
    %v851 = vrot.slane %v844, 2
    %v852 = vrot.slane %v844, 4
    %v853 = vrot.slane %v844, 6
    %860 = vst [vmem:[#allocation3] sm:$0x3] %v841
    %861 = vst [vmem:[#allocation3 + $0x2] sm:$0x3] %v848
    %862 = vst [vmem:[#allocation3 + $0x4] sm:$0x3] %v849
    %863 = vst [vmem:[#allocation3 + $0x6] sm:$0x3] %v850
    %864 = vst [vmem:[#allocation3 + $0x8] sm:$0x3] %v844
    %865 = vst [vmem:[#allocation3 + $0xa] sm:$0x3] %v851
    %866 = vst [vmem:[#allocation3 + $0xc] sm:$0x3] %v852
    %867 = vst [vmem:[#allocation3 + $0xe] sm:$0x3] %v853
    %v868 = vld [vmem:[#allocation15] sm:$0xff]
    %v869 = vld [vmem:[#allocation15 + $0x8] sm:$0xff]
    %v870 = vld [vmem:[#allocation15 + $0x10] sm:$0xff]
    %v871 = vld [vmem:[#allocation15 + $0x18] sm:$0xff]
    %v872 = vld [vmem:[%s9] sm:$0x3]
    %v873 = vld [vmem:[%s10] sm:$0x3]
    %v874 = vld [vmem:[#allocation3] sm:$0x3]
    %v876 = vsel %vm249, %v872, 0
    %878 = vmatpush.msra.mxu0 0.0
    %879 = vmatpush.msra.mxu0 0.0
    %880 = vmatpush.msra.mxu0 0.0
    %881 = vmatpush.msra.mxu0 0.0
    %882 = vmatpush.msra.mxu0 0.0
    %883 = vmatpush.msra.mxu0 0.0
    %884 = vmatpush.msra.mxu0 0.0
    %885 = vmatpush.msra.mxu0 0.0
    %886 = vmatpush.msra.mxu0 0.0
    %887 = vmatpush.msra.mxu0 0.0
    %888 = vmatpush.msra.mxu0 0.0
    %889 = vmatpush.msra.mxu0 0.0
    %890 = vmatpush.msra.mxu0 %v871
    %891 = vmatpush.msra.mxu0 %v870
    %892 = vmatpush.msra.mxu0 %v869
    %893 = vmatpush.msra.mxu0 %v868
    %894 = vmatmul.f32.gmra.mxu0 %v876
    %v895 = vpop.f32.mrf.mxu0
    %v896 = vadd.f32 0.0, %v895
    %897 = vdwg.mxu0
    %v898 = vadd.f32 %v874, %v896
    %v899 = vxor.u32 %v898, 2147483648
    %v900 = vmul.f32 %v899, 1.442695
    %v901 = vpow.pop %v900
    %v902 = vadd.f32 %v901, 1.0
    %v903 = vrcp.pop %v902
    %v904 = vmul.f32 %v902, %v903
    %v905 = vsub.f32 1.0, %v904
    %v906 = vmul.f32 %v903, %v905
    %v907 = vadd.f32 %v903, %v906
    %vm908 = vweird.f32 %v902
    %vm909 = vweird.f32 %v903
    %vm910 = vmor %vm908, %vm909
    %v911 = vsel %vm910, %v903, %v907
    %v912 = vand.u32 2147483647, %v902
    %vm913 = vcmp.eq.f32.partialorder %v912, 8.507059e+37
    %v914 = vand.u32 %v902, 2147483648
    %v915 = vor.u32 1.1754944e-38, %v914
    %v916 = vsel %vm913, %v915, %v911
    %v917 = vmul.f32 1.0, %v916
    %v918 = vtanh.pop %v898
    %920 = vrot.lane.b32.xlu0 %v873, 96
    %v921 = vpop.permute.xlu0 %920
    %v923 = vmul.f32 %v917, %v921
    %925 = vrot.lane.b32.xlu0 %v918, 32
    %v926 = vpop.permute.xlu0 %925
    %v928 = vmul.f32 %v917, %v926
    %930 = vrot.lane.b32.xlu0 %v928, 32
    %v931 = vpop.permute.xlu0 %930
    %v933 = vadd.f32 %v923, %v931
    %v934 = vtanh.pop %v933
    %936 = vrot.lane.b32.xlu0 %v934, 32
    %v937 = vpop.permute.xlu0 %936
    %v939 = vmul.f32 %v917, %v937
    %940 = vst.msk [vmem:[#allocation20] sm:$0x3] %vm315, %v939
    %s941 = scalar_lea.vmem [#allocation3], 2
    %v942 = vld [vmem:[%s941] sm:$0x3]
    %v944 = vsel %vm249, %v939, 0
    %946 = vmatpush.msra.mxu0 0.0
    %947 = vmatpush.msra.mxu0 0.0
    %948 = vmatpush.msra.mxu0 0.0
    %949 = vmatpush.msra.mxu0 0.0
    %950 = vmatpush.msra.mxu0 0.0
    %951 = vmatpush.msra.mxu0 0.0
    %952 = vmatpush.msra.mxu0 0.0
    %953 = vmatpush.msra.mxu0 0.0
    %954 = vmatpush.msra.mxu0 0.0
    %955 = vmatpush.msra.mxu0 0.0
    %956 = vmatpush.msra.mxu0 0.0
    %957 = vmatpush.msra.mxu0 0.0
    %958 = vmatpush.msra.mxu0 %v871
    %959 = vmatpush.msra.mxu0 %v870
    %960 = vmatpush.msra.mxu0 %v869
    %961 = vmatpush.msra.mxu0 %v868
    %962 = vmatmul.f32.gmra.mxu0 %v944
    %v963 = vpop.f32.mrf.mxu0
    %v964 = vadd.f32 0.0, %v963
    %965 = vdwg.mxu0
    %v966 = vadd.f32 %v942, %v964
    %v967 = vxor.u32 %v966, 2147483648
    %v968 = vmul.f32 %v967, 1.442695
    %v969 = vpow.pop %v968
    %v970 = vadd.f32 %v969, 1.0
    %v971 = vrcp.pop %v970
    %v972 = vmul.f32 %v970, %v971
    %v973 = vsub.f32 1.0, %v972
    %v974 = vmul.f32 %v971, %v973
    %v975 = vadd.f32 %v971, %v974
    %vm976 = vweird.f32 %v970
    %vm977 = vweird.f32 %v971
    %vm978 = vmor %vm976, %vm977
    %v979 = vsel %vm978, %v971, %v975
    %v980 = vand.u32 2147483647, %v970
    %vm981 = vcmp.eq.f32.partialorder %v980, 8.507059e+37
    %v982 = vand.u32 %v970, 2147483648
    %v983 = vor.u32 1.1754944e-38, %v982
    %v984 = vsel %vm981, %v983, %v979
    %v985 = vmul.f32 1.0, %v984
    %v986 = vtanh.pop %v966
    %v987 = vmul.f32 %v985, %v933
    %989 = vrot.lane.b32.xlu0 %v986, 32
    %v990 = vpop.permute.xlu0 %989
    %v992 = vmul.f32 %v985, %v990
    %994 = vrot.lane.b32.xlu0 %v992, 32
    %v995 = vpop.permute.xlu0 %994
    %v997 = vadd.f32 %v987, %v995
    %v998 = vtanh.pop %v997
    %1000 = vrot.lane.b32.xlu0 %v998, 32
    %v1001 = vpop.permute.xlu0 %1000
    %v1003 = vmul.f32 %v985, %v1001
    %s1004 = scalar_lea.vmem [#allocation20], 2
    %1005 = vst.msk [vmem:[%s1004] sm:$0x3] %vm315, %v1003
    %s1006 = scalar_lea.vmem [#allocation3], 4
    %v1007 = vld [vmem:[%s1006] sm:$0x3]
    %v1009 = vsel %vm249, %v1003, 0
    %1011 = vmatpush.msra.mxu0 0.0
    %1012 = vmatpush.msra.mxu0 0.0
    %1013 = vmatpush.msra.mxu0 0.0
    %1014 = vmatpush.msra.mxu0 0.0
    %1015 = vmatpush.msra.mxu0 0.0
    %1016 = vmatpush.msra.mxu0 0.0
    %1017 = vmatpush.msra.mxu0 0.0
    %1018 = vmatpush.msra.mxu0 0.0
    %1019 = vmatpush.msra.mxu0 0.0
    %1020 = vmatpush.msra.mxu0 0.0
    %1021 = vmatpush.msra.mxu0 0.0
    %1022 = vmatpush.msra.mxu0 0.0
    %1023 = vmatpush.msra.mxu0 %v871
    %1024 = vmatpush.msra.mxu0 %v870
    %1025 = vmatpush.msra.mxu0 %v869
    %1026 = vmatpush.msra.mxu0 %v868
    %1027 = vmatmul.f32.gmra.mxu0 %v1009
    %v1028 = vpop.f32.mrf.mxu0
    %v1029 = vadd.f32 0.0, %v1028
    %1030 = vdwg.mxu0
    %v1031 = vadd.f32 %v1007, %v1029
    %v1032 = vxor.u32 %v1031, 2147483648
    %v1033 = vmul.f32 %v1032, 1.442695
    %v1034 = vpow.pop %v1033
    %v1035 = vadd.f32 %v1034, 1.0
    %v1036 = vrcp.pop %v1035
    %v1037 = vmul.f32 %v1035, %v1036
    %v1038 = vsub.f32 1.0, %v1037
    %v1039 = vmul.f32 %v1036, %v1038
    %v1040 = vadd.f32 %v1036, %v1039
    %vm1041 = vweird.f32 %v1035
    %vm1042 = vweird.f32 %v1036
    %vm1043 = vmor %vm1041, %vm1042
    %v1044 = vsel %vm1043, %v1036, %v1040
    %v1045 = vand.u32 2147483647, %v1035
    %vm1046 = vcmp.eq.f32.partialorder %v1045, 8.507059e+37
    %v1047 = vand.u32 %v1035, 2147483648
    %v1048 = vor.u32 1.1754944e-38, %v1047
    %v1049 = vsel %vm1046, %v1048, %v1044
    %v1050 = vmul.f32 1.0, %v1049
    %v1051 = vtanh.pop %v1031
    %v1052 = vmul.f32 %v1050, %v997
    %1054 = vrot.lane.b32.xlu0 %v1051, 32
    %v1055 = vpop.permute.xlu0 %1054
    %v1057 = vmul.f32 %v1050, %v1055
    %1059 = vrot.lane.b32.xlu0 %v1057, 32
    %v1060 = vpop.permute.xlu0 %1059
    %v1062 = vadd.f32 %v1052, %v1060
    %v1063 = vtanh.pop %v1062
    %1065 = vrot.lane.b32.xlu0 %v1063, 32
    %v1066 = vpop.permute.xlu0 %1065
    %v1068 = vmul.f32 %v1050, %v1066
    %s1069 = scalar_lea.vmem [#allocation20], 4
    %1070 = vst.msk [vmem:[%s1069] sm:$0x3] %vm315, %v1068
    %s1071 = scalar_lea.vmem [#allocation3], 6
    %v1072 = vld [vmem:[%s1071] sm:$0x3]
    %v1074 = vsel %vm249, %v1068, 0
    %1076 = vmatpush.msra.mxu0 0.0
    %1077 = vmatpush.msra.mxu0 0.0
    %1078 = vmatpush.msra.mxu0 0.0
    %1079 = vmatpush.msra.mxu0 0.0
    %1080 = vmatpush.msra.mxu0 0.0
    %1081 = vmatpush.msra.mxu0 0.0
    %1082 = vmatpush.msra.mxu0 0.0
    %1083 = vmatpush.msra.mxu0 0.0
    %1084 = vmatpush.msra.mxu0 0.0
    %1085 = vmatpush.msra.mxu0 0.0
    %1086 = vmatpush.msra.mxu0 0.0
    %1087 = vmatpush.msra.mxu0 0.0
    %1088 = vmatpush.msra.mxu0 %v871
    %1089 = vmatpush.msra.mxu0 %v870
    %1090 = vmatpush.msra.mxu0 %v869
    %1091 = vmatpush.msra.mxu0 %v868
    %1092 = vmatmul.f32.gmra.mxu0 %v1074
    %v1093 = vpop.f32.mrf.mxu0
    %v1094 = vadd.f32 0.0, %v1093
    %1095 = vdwg.mxu0
    %v1096 = vadd.f32 %v1072, %v1094
    %v1097 = vxor.u32 %v1096, 2147483648
    %v1098 = vmul.f32 %v1097, 1.442695
    %v1099 = vpow.pop %v1098
    %v1100 = vadd.f32 %v1099, 1.0
    %v1101 = vrcp.pop %v1100
    %v1102 = vmul.f32 %v1100, %v1101
    %v1103 = vsub.f32 1.0, %v1102
    %v1104 = vmul.f32 %v1101, %v1103
    %v1105 = vadd.f32 %v1101, %v1104
    %vm1106 = vweird.f32 %v1100
    %vm1107 = vweird.f32 %v1101
    %vm1108 = vmor %vm1106, %vm1107
    %v1109 = vsel %vm1108, %v1101, %v1105
    %v1110 = vand.u32 2147483647, %v1100
    %vm1111 = vcmp.eq.f32.partialorder %v1110, 8.507059e+37
    %v1112 = vand.u32 %v1100, 2147483648
    %v1113 = vor.u32 1.1754944e-38, %v1112
    %v1114 = vsel %vm1111, %v1113, %v1109
    %v1115 = vmul.f32 1.0, %v1114
    %v1116 = vtanh.pop %v1096
    %v1117 = vmul.f32 %v1115, %v1062
    %1119 = vrot.lane.b32.xlu0 %v1116, 32
    %v1120 = vpop.permute.xlu0 %1119
    %v1122 = vmul.f32 %v1115, %v1120
    %1124 = vrot.lane.b32.xlu0 %v1122, 32
    %v1125 = vpop.permute.xlu0 %1124
    %v1127 = vadd.f32 %v1117, %v1125
    %v1128 = vtanh.pop %v1127
    %1130 = vrot.lane.b32.xlu0 %v1128, 32
    %v1131 = vpop.permute.xlu0 %1130
    %v1133 = vmul.f32 %v1115, %v1131
    %s1134 = scalar_lea.vmem [#allocation20], 6
    %1135 = vst.msk [vmem:[%s1134] sm:$0x3] %vm315, %v1133
    %s1136 = scalar_lea.vmem [#allocation3], 8
    %v1137 = vld [vmem:[%s1136] sm:$0x3]
    %v1139 = vsel %vm249, %v1133, 0
    %1141 = vmatpush.msra.mxu0 0.0
    %1142 = vmatpush.msra.mxu0 0.0
    %1143 = vmatpush.msra.mxu0 0.0
    %1144 = vmatpush.msra.mxu0 0.0
    %1145 = vmatpush.msra.mxu0 0.0
    %1146 = vmatpush.msra.mxu0 0.0
    %1147 = vmatpush.msra.mxu0 0.0
    %1148 = vmatpush.msra.mxu0 0.0
    %1149 = vmatpush.msra.mxu0 0.0
    %1150 = vmatpush.msra.mxu0 0.0
    %1151 = vmatpush.msra.mxu0 0.0
    %1152 = vmatpush.msra.mxu0 0.0
    %1153 = vmatpush.msra.mxu0 %v871
    %1154 = vmatpush.msra.mxu0 %v870
    %1155 = vmatpush.msra.mxu0 %v869
    %1156 = vmatpush.msra.mxu0 %v868
    %1157 = vmatmul.f32.gmra.mxu0 %v1139
    %v1158 = vpop.f32.mrf.mxu0
    %v1159 = vadd.f32 0.0, %v1158
    %1160 = vdwg.mxu0
    %v1161 = vadd.f32 %v1137, %v1159
    %v1162 = vxor.u32 %v1161, 2147483648
    %v1163 = vmul.f32 %v1162, 1.442695
    %v1164 = vpow.pop %v1163
    %v1165 = vadd.f32 %v1164, 1.0
    %v1166 = vrcp.pop %v1165
    %v1167 = vmul.f32 %v1165, %v1166
    %v1168 = vsub.f32 1.0, %v1167
    %v1169 = vmul.f32 %v1166, %v1168
    %v1170 = vadd.f32 %v1166, %v1169
    %vm1171 = vweird.f32 %v1165
    %vm1172 = vweird.f32 %v1166
    %vm1173 = vmor %vm1171, %vm1172
    %v1174 = vsel %vm1173, %v1166, %v1170
    %v1175 = vand.u32 2147483647, %v1165
    %vm1176 = vcmp.eq.f32.partialorder %v1175, 8.507059e+37
    %v1177 = vand.u32 %v1165, 2147483648
    %v1178 = vor.u32 1.1754944e-38, %v1177
    %v1179 = vsel %vm1176, %v1178, %v1174
    %v1180 = vmul.f32 1.0, %v1179
    %v1181 = vtanh.pop %v1161
    %v1182 = vmul.f32 %v1180, %v1127
    %1184 = vrot.lane.b32.xlu0 %v1181, 32
    %v1185 = vpop.permute.xlu0 %1184
    %v1187 = vmul.f32 %v1180, %v1185
    %1189 = vrot.lane.b32.xlu0 %v1187, 32
    %v1190 = vpop.permute.xlu0 %1189
    %v1192 = vadd.f32 %v1182, %v1190
    %v1193 = vtanh.pop %v1192
    %1195 = vrot.lane.b32.xlu0 %v1193, 32
    %v1196 = vpop.permute.xlu0 %1195
    %v1198 = vmul.f32 %v1180, %v1196
    %s1199 = scalar_lea.vmem [#allocation20], 8
    %1200 = vst.msk [vmem:[%s1199] sm:$0x3] %vm315, %v1198
    %s1201 = scalar_lea.vmem [#allocation3], 10
    %v1202 = vld [vmem:[%s1201] sm:$0x3]
    %v1204 = vsel %vm249, %v1198, 0
    %1206 = vmatpush.msra.mxu0 0.0
    %1207 = vmatpush.msra.mxu0 0.0
    %1208 = vmatpush.msra.mxu0 0.0
    %1209 = vmatpush.msra.mxu0 0.0
    %1210 = vmatpush.msra.mxu0 0.0
    %1211 = vmatpush.msra.mxu0 0.0
    %1212 = vmatpush.msra.mxu0 0.0
    %1213 = vmatpush.msra.mxu0 0.0
    %1214 = vmatpush.msra.mxu0 0.0
    %1215 = vmatpush.msra.mxu0 0.0
    %1216 = vmatpush.msra.mxu0 0.0
    %1217 = vmatpush.msra.mxu0 0.0
    %1218 = vmatpush.msra.mxu0 %v871
    %1219 = vmatpush.msra.mxu0 %v870
    %1220 = vmatpush.msra.mxu0 %v869
    %1221 = vmatpush.msra.mxu0 %v868
    %1222 = vmatmul.f32.gmra.mxu0 %v1204
    %v1223 = vpop.f32.mrf.mxu0
    %v1224 = vadd.f32 0.0, %v1223
    %1225 = vdwg.mxu0
    %v1226 = vadd.f32 %v1202, %v1224
    %v1227 = vxor.u32 %v1226, 2147483648
    %v1228 = vmul.f32 %v1227, 1.442695
    %v1229 = vpow.pop %v1228
    %v1230 = vadd.f32 %v1229, 1.0
    %v1231 = vrcp.pop %v1230
    %v1232 = vmul.f32 %v1230, %v1231
    %v1233 = vsub.f32 1.0, %v1232
    %v1234 = vmul.f32 %v1231, %v1233
    %v1235 = vadd.f32 %v1231, %v1234
    %vm1236 = vweird.f32 %v1230
    %vm1237 = vweird.f32 %v1231
    %vm1238 = vmor %vm1236, %vm1237
    %v1239 = vsel %vm1238, %v1231, %v1235
    %v1240 = vand.u32 2147483647, %v1230
    %vm1241 = vcmp.eq.f32.partialorder %v1240, 8.507059e+37
    %v1242 = vand.u32 %v1230, 2147483648
    %v1243 = vor.u32 1.1754944e-38, %v1242
    %v1244 = vsel %vm1241, %v1243, %v1239
    %v1245 = vmul.f32 1.0, %v1244
    %v1246 = vtanh.pop %v1226
    %v1247 = vmul.f32 %v1245, %v1192
    %1249 = vrot.lane.b32.xlu0 %v1246, 32
    %v1250 = vpop.permute.xlu0 %1249
    %v1252 = vmul.f32 %v1245, %v1250
    %1254 = vrot.lane.b32.xlu0 %v1252, 32
    %v1255 = vpop.permute.xlu0 %1254
    %v1257 = vadd.f32 %v1247, %v1255
    %v1258 = vtanh.pop %v1257
    %1260 = vrot.lane.b32.xlu0 %v1258, 32
    %v1261 = vpop.permute.xlu0 %1260
    %v1263 = vmul.f32 %v1245, %v1261
    %s1264 = scalar_lea.vmem [#allocation20], 10
    %1265 = vst.msk [vmem:[%s1264] sm:$0x3] %vm315, %v1263
    %s1266 = scalar_lea.vmem [#allocation3], 12
    %v1267 = vld [vmem:[%s1266] sm:$0x3]
    %v1269 = vsel %vm249, %v1263, 0
    %1271 = vmatpush.msra.mxu0 0.0
    %1272 = vmatpush.msra.mxu0 0.0
    %1273 = vmatpush.msra.mxu0 0.0
    %1274 = vmatpush.msra.mxu0 0.0
    %1275 = vmatpush.msra.mxu0 0.0
    %1276 = vmatpush.msra.mxu0 0.0
    %1277 = vmatpush.msra.mxu0 0.0
    %1278 = vmatpush.msra.mxu0 0.0
    %1279 = vmatpush.msra.mxu0 0.0
    %1280 = vmatpush.msra.mxu0 0.0
    %1281 = vmatpush.msra.mxu0 0.0
    %1282 = vmatpush.msra.mxu0 0.0
    %1283 = vmatpush.msra.mxu0 %v871
    %1284 = vmatpush.msra.mxu0 %v870
    %1285 = vmatpush.msra.mxu0 %v869
    %1286 = vmatpush.msra.mxu0 %v868
    %1287 = vmatmul.f32.gmra.mxu0 %v1269
    %v1288 = vpop.f32.mrf.mxu0
    %v1289 = vadd.f32 0.0, %v1288
    %1290 = vdwg.mxu0
    %v1291 = vadd.f32 %v1267, %v1289
    %v1292 = vxor.u32 %v1291, 2147483648
    %v1293 = vmul.f32 %v1292, 1.442695
    %v1294 = vpow.pop %v1293
    %v1295 = vadd.f32 %v1294, 1.0
    %v1296 = vrcp.pop %v1295
    %v1297 = vmul.f32 %v1295, %v1296
    %v1298 = vsub.f32 1.0, %v1297
    %v1299 = vmul.f32 %v1296, %v1298
    %v1300 = vadd.f32 %v1296, %v1299
    %vm1301 = vweird.f32 %v1295
    %vm1302 = vweird.f32 %v1296
    %vm1303 = vmor %vm1301, %vm1302
    %v1304 = vsel %vm1303, %v1296, %v1300
    %v1305 = vand.u32 2147483647, %v1295
    %vm1306 = vcmp.eq.f32.partialorder %v1305, 8.507059e+37
    %v1307 = vand.u32 %v1295, 2147483648
    %v1308 = vor.u32 1.1754944e-38, %v1307
    %v1309 = vsel %vm1306, %v1308, %v1304
    %v1310 = vmul.f32 1.0, %v1309
    %v1311 = vtanh.pop %v1291
    %v1312 = vmul.f32 %v1310, %v1257
    %1314 = vrot.lane.b32.xlu0 %v1311, 32
    %v1315 = vpop.permute.xlu0 %1314
    %v1317 = vmul.f32 %v1310, %v1315
    %1319 = vrot.lane.b32.xlu0 %v1317, 32
    %v1320 = vpop.permute.xlu0 %1319
    %v1322 = vadd.f32 %v1312, %v1320
    %v1323 = vtanh.pop %v1322
    %1325 = vrot.lane.b32.xlu0 %v1323, 32
    %v1326 = vpop.permute.xlu0 %1325
    %v1328 = vmul.f32 %v1310, %v1326
    %s1329 = scalar_lea.vmem [#allocation20], 12
    %1330 = vst.msk [vmem:[%s1329] sm:$0x3] %vm315, %v1328
    %s1331 = scalar_lea.vmem [#allocation3], 14
    %v1332 = vld [vmem:[%s1331] sm:$0x3]
    %v1334 = vsel %vm249, %v1328, 0
    %1336 = vmatpush.msra.mxu0 0.0
    %1337 = vmatpush.msra.mxu0 0.0
    %1338 = vmatpush.msra.mxu0 0.0
    %1339 = vmatpush.msra.mxu0 0.0
    %1340 = vmatpush.msra.mxu0 0.0
    %1341 = vmatpush.msra.mxu0 0.0
    %1342 = vmatpush.msra.mxu0 0.0
    %1343 = vmatpush.msra.mxu0 0.0
    %1344 = vmatpush.msra.mxu0 0.0
    %1345 = vmatpush.msra.mxu0 0.0
    %1346 = vmatpush.msra.mxu0 0.0
    %1347 = vmatpush.msra.mxu0 0.0
    %1348 = vmatpush.msra.mxu0 %v871
    %1349 = vmatpush.msra.mxu0 %v870
    %1350 = vmatpush.msra.mxu0 %v869
    %1351 = vmatpush.msra.mxu0 %v868
    %1352 = vmatmul.f32.gmra.mxu0 %v1334
    %v1353 = vpop.f32.mrf.mxu0
    %v1354 = vadd.f32 0.0, %v1353
    %1355 = vdwg.mxu0
    %v1356 = vadd.f32 %v1332, %v1354
    %v1357 = vxor.u32 %v1356, 2147483648
    %v1358 = vmul.f32 %v1357, 1.442695
    %v1359 = vpow.pop %v1358
    %v1360 = vadd.f32 %v1359, 1.0
    %v1361 = vrcp.pop %v1360
    %v1362 = vmul.f32 %v1360, %v1361
    %v1363 = vsub.f32 1.0, %v1362
    %v1364 = vmul.f32 %v1361, %v1363
    %v1365 = vadd.f32 %v1361, %v1364
    %vm1366 = vweird.f32 %v1360
    %vm1367 = vweird.f32 %v1361
    %vm1368 = vmor %vm1366, %vm1367
    %v1369 = vsel %vm1368, %v1361, %v1365
    %v1370 = vand.u32 2147483647, %v1360
    %vm1371 = vcmp.eq.f32.partialorder %v1370, 8.507059e+37
    %v1372 = vand.u32 %v1360, 2147483648
    %v1373 = vor.u32 1.1754944e-38, %v1372
    %v1374 = vsel %vm1371, %v1373, %v1369
    %v1375 = vmul.f32 1.0, %v1374
    %v1376 = vtanh.pop %v1356
    %v1377 = vmul.f32 %v1375, %v1322
    %1379 = vrot.lane.b32.xlu0 %v1376, 32
    %v1380 = vpop.permute.xlu0 %1379
    %v1382 = vmul.f32 %v1375, %v1380
    %1384 = vrot.lane.b32.xlu0 %v1382, 32
    %v1385 = vpop.permute.xlu0 %1384
    %v1387 = vadd.f32 %v1377, %v1385
    %v1388 = vtanh.pop %v1387
    %1390 = vrot.lane.b32.xlu0 %v1388, 32
    %v1391 = vpop.permute.xlu0 %1390
    %v1393 = vmul.f32 %v1375, %v1391
    %s1394 = scalar_lea.vmem [#allocation20], 14
    %1395 = vst.msk [vmem:[%s1394] sm:$0x3] %vm315, %v1393
    %1396 = vst.msk [vmem:[#allocation22] sm:$0x3] %vm315, %v1393
    %1398 = vrot.lane.b32.xlu0 %v1387, 32
    %v1399 = vpop.permute.xlu0 %1398
    %1401 = vst.msk [vmem:[#allocation23] sm:$0x3] %vm315, %v1399
    // Predicated region
    $region74: #{tpu_custom_call.1} parent=1 // pred_check
      _
    $region75: #{tpu_custom_call.1} parent=1 // pred_check_branch
      %1403 = sbr.rel (0) target = $region77
    $region76: #{tpu_custom_call.1} parent=1 // pred_region
      %1405 = vsyncadd [#allocation6], 0
      %s1406 = sshll.u32 [#allocation16], 4
      %s1407 = int_to_ptr.vmem [resolvable:$true] %s1406
      %s1408 = sshll.u32 %s11, 4
      %s1409 = int_to_ptr.hbm [resolvable:$true] %s1408
      %1414 = dma.vmem_to_hbm [thread:$0]  %s1407, 256, %s1409, [#allocation6], 32, 32, 2
    $region77: #{tpu_custom_call.1} parent=1 // pred_fallthru
      _
    // Predicated region
    $region78: #{tpu_custom_call.1} parent=1 // pred_check
      _
    $region79: #{tpu_custom_call.1} parent=1 // pred_check_branch
      %1416 = sbr.rel (0) target = $region81
    $region80: #{tpu_custom_call.1} parent=1 // pred_region
      %1418 = vsyncadd [#allocation18], 0
      %s1420 = sshll.u32 [#allocation17], 4
      %s1421 = int_to_ptr.vmem [resolvable:$true] %s1420
      %s1422 = sshll.u32 %s12, 4
      %s1423 = int_to_ptr.hbm [resolvable:$true] %s1422
      %1425 = dma.vmem_to_hbm [thread:$0]  %s1421, 32, %s1423, [#allocation18]
    $region81: #{tpu_custom_call.1} parent=1 // pred_fallthru
      _
    // Predicated region
    $region82: #{tpu_custom_call.1} parent=1 // pred_check
      _
    $region83: #{tpu_custom_call.1} parent=1 // pred_check_branch
      %1427 = sbr.rel (0) target = $region85
    $region84: #{tpu_custom_call.1} parent=1 // pred_region
      %1429 = vsyncadd [#allocation18], 0
      %s1431 = sshll.u32 [#allocation19], 4
      %s1432 = int_to_ptr.vmem [resolvable:$true] %s1431
      %s1433 = sshll.u32 %s13, 4
      %s1434 = int_to_ptr.hbm [resolvable:$true] %s1433
      %1436 = dma.vmem_to_hbm [thread:$0]  %s1432, 32, %s1434, [#allocation18]
    $region85: #{tpu_custom_call.1} parent=1 // pred_fallthru
      _
    // Predicated region
    $region86: #{tpu_custom_call.1} parent=1 // pred_check
      _
    $region87: #{tpu_custom_call.1} parent=1 // pred_check_branch
      %1438 = sbr.rel (0) target = $region89
    $region88: #{tpu_custom_call.1} parent=1 // pred_region
      %1440 = vsyncadd [#allocation21], 0
      %s1441 = sshll.u32 [#allocation20], 4
      %s1442 = int_to_ptr.vmem [resolvable:$true] %s1441
      %s1443 = sshll.u32 %s14, 4
      %s1444 = int_to_ptr.hbm [resolvable:$true] %s1443
      %1449 = dma.vmem_to_hbm [thread:$0]  %s1442, 256, %s1444, [#allocation21], 32, 32, 2
    $region89: #{tpu_custom_call.1} parent=1 // pred_fallthru
      _
    // Predicated region
    $region90: #{tpu_custom_call.1} parent=1 // pred_check
      _
    $region91: #{tpu_custom_call.1} parent=1 // pred_check_branch
      %1451 = sbr.rel (0) target = $region93
    $region92: #{tpu_custom_call.1} parent=1 // pred_region
      %1453 = vsyncadd [#allocation21], 0
      %s1455 = sshll.u32 [#allocation22], 4
      %s1456 = int_to_ptr.vmem [resolvable:$true] %s1455
      %s1457 = sshll.u32 %s15, 4
      %s1458 = int_to_ptr.hbm [resolvable:$true] %s1457
      %1460 = dma.vmem_to_hbm [thread:$0]  %s1456, 32, %s1458, [#allocation21]
    $region93: #{tpu_custom_call.1} parent=1 // pred_fallthru
      _
    // Predicated region
    $region94: #{tpu_custom_call.1} parent=1 // pred_check
      _
    $region95: #{tpu_custom_call.1} parent=1 // pred_check_branch
      %1462 = sbr.rel (0) target = $region97
    $region96: #{tpu_custom_call.1} parent=1 // pred_region
      %1464 = vsyncadd [#allocation24], 0
      %s1466 = sshll.u32 [#allocation23], 4
      %s1467 = int_to_ptr.vmem [resolvable:$true] %s1466
      %s1468 = sshll.u32 %s16, 4
      %s1469 = int_to_ptr.hbm [resolvable:$true] %s1468
      %1471 = dma.vmem_to_hbm [thread:$0]  %s1467, 32, %s1469, [#allocation24]
    $region97: #{tpu_custom_call.1} parent=1 // pred_fallthru
      _
    // Predicated region
    $region98: #{tpu_custom_call.1} parent=1 // pred_check
      _
    $region99: #{tpu_custom_call.1} parent=1 // pred_check_branch
      %1473 = sbr.rel (0) target = $region101
    $region100: #{tpu_custom_call.1} parent=1 // pred_region
      %1475 = dma.done [#allocation6], 256
    $region101: #{tpu_custom_call.1} parent=1 // pred_fallthru
      _
    // Predicated region
    $region102: #{tpu_custom_call.1} parent=1 // pred_check
      _
    $region103: #{tpu_custom_call.1} parent=1 // pred_check_branch
      %1477 = sbr.rel (0) target = $region105
    $region104: #{tpu_custom_call.1} parent=1 // pred_region
      %1479 = dma.done [#allocation18], 32
    $region105: #{tpu_custom_call.1} parent=1 // pred_fallthru
      _
    // Predicated region
    $region106: #{tpu_custom_call.1} parent=1 // pred_check
      _
    $region107: #{tpu_custom_call.1} parent=1 // pred_check_branch
      %1481 = sbr.rel (0) target = $region109
    $region108: #{tpu_custom_call.1} parent=1 // pred_region
      %1483 = dma.done [#allocation18], 32
    $region109: #{tpu_custom_call.1} parent=1 // pred_fallthru
      _
    // Predicated region
    $region110: #{tpu_custom_call.1} parent=1 // pred_check
      _
    $region111: #{tpu_custom_call.1} parent=1 // pred_check_branch
      %1485 = sbr.rel (0) target = $region113
    $region112: #{tpu_custom_call.1} parent=1 // pred_region
      %1487 = dma.done [#allocation21], 256
    $region113: #{tpu_custom_call.1} parent=1 // pred_fallthru
      _
    // Predicated region
    $region114: #{tpu_custom_call.1} parent=1 // pred_check
      _
    $region115: #{tpu_custom_call.1} parent=1 // pred_check_branch
      %1489 = sbr.rel (0) target = $region117
    $region116: #{tpu_custom_call.1} parent=1 // pred_region
      %1491 = dma.done [#allocation21], 32
    $region117: #{tpu_custom_call.1} parent=1 // pred_fallthru
      _
    // Predicated region
    $region118: #{tpu_custom_call.1} parent=1 // pred_check
      _
    $region119: #{tpu_custom_call.1} parent=1 // pred_check_branch
      %1493 = sbr.rel (0) target = $region121
    $region120: #{tpu_custom_call.1} parent=1 // pred_region
      %1495 = dma.done [#allocation24], 32
    $region121: #{tpu_custom_call.1} parent=1 // pred_fallthru
      _
    %1496 = vsyncpa [#allocation5], 1
    %1497 = vsyncpa [#allocation8], 1
    %1498 = vsyncpa [#allocation11], 1
    %1499 = vsyncpa [#allocation14], 1
    %1500 = vsyncpa [#allocation6], 1
    %1501 = vsyncpa [#allocation18], 1
    %1502 = vsyncpa [#allocation21], 1
    %1503 = vsyncpa [#allocation24], 1

</llo_original>
